<compile_context>
chip_gen: v6e
topology: v6e:2x2x1
jax: 0.10.0
libtpu: 0.0.40
codegen_flags: <defaults>
</compile_context>

<pallas_src>
import jax
import jax.numpy as jnp
from jax.experimental import pallas as pl
from jax.experimental.pallas import tpu as pltpu

# ----- config (matches cfg.PROPOSAL.MLPS = [32, 32], NUM_CLASSES=3, BOX_DOF=7) -----
NUM_CLASSES = 3
BOX_DOF = 7
MLPS = [32, 32]
C_IN = MLPS[0]
HIDDEN = MLPS[1]
D_BOX = NUM_CLASSES * BOX_DOF          # 21 box-regression channels (class-major)
D_OUT = NUM_CLASSES * (BOX_DOF + 1)    # 24 raw MLP outputs
D_BOX_PAD = 24                         # box rows padded to an 8-sublane boundary
D_PAD = 32                             # total slab rows: boxes 0:21, scores 24:27
DEFAULT_TN = 2048                      # point tile on the lane axis (sweep 1024-8192)


def proposal_kernel(x_ref, w1t_ref, b1_ref, w2t_ref, b2_ref, out_ref):
    """One (batch, point-tile) block, channels-first / lane-dense.

    x_ref   : (1, C_IN, TN)   features tile (native channels-first layout)
    w1t_ref : (HIDDEN, C_IN)  first Linear weight, transposed
    b1_ref  : (HIDDEN, 1)     first Linear bias (broadcast over lanes)
    w2t_ref : (D_PAD, HIDDEN) merged+padded second Linear weight, transposed
                              (rows 0:21 = box outputs class-major, 24:27 = score logits)
    b2_ref  : (D_PAD, 1)      merged+padded second Linear bias
    out_ref : (1, D_PAD, TN)  output slab: rows 0:21 boxes, rows 24:27 softmax scores
    """
    x = x_ref[0]                                           # (C_IN, TN)

    # Layer 1: Linear + ReLU (MXU, f32 accumulate; input may be f32 or bf16).
    h = jnp.dot(w1t_ref[...], x, preferred_element_type=jnp.float32) + b1_ref[...]
    h = jnp.maximum(h, 0.0)                                # (HIDDEN, TN) f32
    h = h.astype(x.dtype)                                  # feed MXU in input dtype

    # Layer 2: ONE matmul producing boxes and score logits together
    # (weight pre-permuted/padded on host -> no in-kernel per-class shuffles).
    mm = jnp.dot(w2t_ref[...], h, preferred_element_type=jnp.float32) + b2_ref[...]
    # mm: (D_PAD, TN) f32; rows 0:21 boxes, 21:24 zero, 24:27 score logits, 27:32 zero.

    # Softmax over the 3 classes, computed on the aligned 8-row tile [24:32)
    # with a sublane mask (rows >= NUM_CLASSES contribute exp=0). VPU/EUP only.
    s8 = mm[D_BOX_PAD:, :]                                 # (8, TN), aligned slice
    row = jax.lax.broadcasted_iota(jnp.int32, s8.shape, 0)
    valid = row < NUM_CLASSES
    m = jnp.max(jnp.where(valid, s8, -jnp.inf), axis=0, keepdims=True)   # (1, TN)
    e = jnp.where(valid, jnp.exp(s8 - m), 0.0)                           # (8, TN)
    denom = jnp.sum(e, axis=0, keepdims=True)                            # (1, TN)
    sm = e * pl.reciprocal(denom, approx=False)            # exact: holds 1e-5 vs ref

    # Single full-block, unmasked, lane-dense store (concat at an 8-row boundary).
    out = jnp.concatenate([mm[:D_BOX_PAD, :], sm], axis=0)  # (D_PAD, TN)
    out_ref[0] = out.astype(out_ref.dtype)


def _round_up(x, m):
    return ((x + m - 1) // m) * m


def _prep_params(w1, b1, w2, b2, compute_dtype):
    """Tiny one-time host-side weight preprocessing (pre-permute / pad / transpose)."""
    w2r = w2.reshape(HIDDEN, NUM_CLASSES, BOX_DOF + 1)
    w2_box = w2r[:, :, :BOX_DOF].reshape(HIDDEN, D_BOX)     # class-major: col c*7 + d
    w2_scr = w2r[:, :, BOX_DOF]                             # (HIDDEN, NUM_CLASSES)
    w2p = jnp.zeros((HIDDEN, D_PAD), jnp.float32)
    w2p = w2p.at[:, :D_BOX].set(w2_box)
    w2p = w2p.at[:, D_BOX_PAD:D_BOX_PAD + NUM_CLASSES].set(w2_scr)

    b2r = b2.reshape(NUM_CLASSES, BOX_DOF + 1)
    b2p = jnp.zeros((D_PAD,), jnp.float32)
    b2p = b2p.at[:D_BOX].set(b2r[:, :BOX_DOF].reshape(D_BOX))
    b2p = b2p.at[D_BOX_PAD:D_BOX_PAD + NUM_CLASSES].set(b2r[:, BOX_DOF])

    w1t = w1.T.astype(compute_dtype)            # (HIDDEN, C_IN)
    w2pt = w2p.T.astype(compute_dtype)          # (D_PAD, HIDDEN)
    b1c = b1.reshape(HIDDEN, 1).astype(jnp.float32)
    b2c = b2p.reshape(D_PAD, 1).astype(jnp.float32)
    return w1t, b1c, w2pt, b2c


def proposal_layer_cf(features, w1, b1, w2, b2, *, tn=DEFAULT_TN,
                      use_bf16=False, out_dtype=None):
    """Channels-first (transpose-free) fast path.

    features: (B, C_in, N)  (PyTorch NCL layout, consumed natively).
    Returns:
      boxes_cf : (B, D_BOX, N)        class-major box regression, channels-first
      scores_cf: (B, NUM_CLASSES, N)  softmax scores, channels-first
    Inference top-k runs along the last axis of scores_cf directly — no transpose.
    bf16 is recommended on v5e/v6e/v7x (the kernel is HBM-bandwidth-bound).
    """
    B, C, N = features.shape
    assert C == C_IN
    compute_dtype = jnp.bfloat16 if use_bf16 else jnp.float32
    if out_dtype is None:
        out_dtype = compute_dtype                       # quantize the output stream too

    w1t, b1c, w2pt, b2c = _prep_params(w1, b1, w2, b2, compute_dtype)

    # ---- tile sizing: multiple of 128, ragged N padded, >=2 tiles when B==1 ----
    tn = max(128, (int(tn) // 128) * 128)
    n_min = _round_up(N, 128)
    if B == 1 and n_min > 128:
        # guarantee >=2 parallel grid steps so both v7x TensorCores get work
        tn = min(tn, _round_up(n_min // 2, 128))
    tn = min(tn, n_min)
    n_pad = _round_up(N, tn)

    x = features.astype(compute_dtype)
    if n_pad != N:
        x = jnp.pad(x, ((0, 0), (0, 0), (0, n_pad - N)))

    grid = (B, n_pad // tn)
    slab = pl.pallas_call(
        proposal_kernel,
        out_shape=jax.ShapeDtypeStruct((B, D_PAD, n_pad), out_dtype),
        grid_spec=pltpu.PrefetchScalarGridSpec(
            num_scalar_prefetch=0,
            grid=grid,
            in_specs=[
                pl.BlockSpec((1, C_IN, tn), lambda b, n: (b, 0, n)),
                pl.BlockSpec((HIDDEN, C_IN), lambda b, n: (0, 0)),
                pl.BlockSpec((HIDDEN, 1), lambda b, n: (0, 0)),
                pl.BlockSpec((D_PAD, HIDDEN), lambda b, n: (0, 0)),
                pl.BlockSpec((D_PAD, 1), lambda b, n: (0, 0)),
            ],
            out_specs=pl.BlockSpec((1, D_PAD, tn), lambda b, n: (b, 0, n)),
        ),
        compiler_params=pltpu.CompilerParams(
            dimension_semantics=("parallel", "parallel"),
            vmem_limit_bytes=32 * 1024 * 1024),
    )(x, w1t, b1c, w2pt, b2c)

    # Cheap channel/point slices (no full-output transpose); these fuse with
    # downstream consumers (e.g. jax.lax.top_k along the last axis) under jit.
    boxes_cf = slab[:, :D_BOX, :N]
    scores_cf = slab[:, D_BOX_PAD:D_BOX_PAD + NUM_CLASSES, :N]
    return boxes_cf, scores_cf


def proposal_layer(features, w1, b1, w2, b2, **kwargs):
    """Module-layout compatibility path (matches ProposalLayer.forward exactly).

    Returns boxes (B, N, NUM_CLASSES, BOX_DOF) and scores (B, N, NUM_CLASSES).
    NOTE: the transpose here re-streams the output through HBM; production
    consumers (inference top-k) should use `proposal_layer_cf` instead.
    """
    boxes_cf, scores_cf = proposal_layer_cf(features, w1, b1, w2, b2, **kwargs)
    B, _, N = boxes_cf.shape
    boxes = jnp.transpose(boxes_cf, (0, 2, 1)).reshape(B, N, NUM_CLASSES, BOX_DOF)
    scores = jnp.transpose(scores_cf, (0, 2, 1))
    return boxes, scores


def _reference(features, w1, b1, w2, b2):
    x = jnp.transpose(features, (0, 2, 1))
    h = jnp.maximum(jnp.einsum("bnc,ch->bnh", x, w1) + b1, 0.0)
    p = jnp.einsum("bnh,hd->bnd", h, w2) + b2
    p = p.reshape(*p.shape[:2], NUM_CLASSES, BOX_DOF + 1)
    boxes = p[..., :BOX_DOF]
    scores = jax.nn.softmax(p[..., BOX_DOF], axis=-1)
    return boxes, scores


if __name__ == "__main__":
    key = jax.random.PRNGKey(0)
    k_feat, k_w1, k_b1, k_w2, k_b2, k_feat2 = jax.random.split(key, 6)

    # PV-RCNN-like keypoint counts (small, tile-amortizing).
    B, N = 2, 2048
    features = jax.random.normal(k_feat, (B, C_IN, N), dtype=jnp.float32)

    # Deterministic synthetic parameters (no checkpoint loading).
    w1 = jax.random.normal(k_w1, (C_IN, HIDDEN), dtype=jnp.float32) * 0.1
    b1 = jax.random.normal(k_b1, (HIDDEN,), dtype=jnp.float32) * 0.1
    w2 = jax.random.normal(k_w2, (HIDDEN, D_OUT), dtype=jnp.float32) * 0.1
    b2 = jax.random.normal(k_b2, (D_OUT,), dtype=jnp.float32) * 0.1

    ref_boxes, ref_scores = _reference(features, w1, b1, w2, b2)

    # ---- f32 path (module layout, exact match with the reference) ----
    boxes, scores = proposal_layer(features, w1, b1, w2, b2)
    jax.block_until_ready((boxes, scores))
    assert boxes.shape == (B, N, NUM_CLASSES, BOX_DOF)
    assert scores.shape == (B, N, NUM_CLASSES)
    assert jnp.allclose(boxes, ref_boxes, atol=1e-5, rtol=1e-5)
    assert jnp.allclose(scores, ref_scores, atol=1e-5, rtol=1e-5)

    # ---- channels-first (transpose-free) path: inference-style consumption ----
    boxes_cf, scores_cf = proposal_layer_cf(features, w1, b1, w2, b2)
    jax.block_until_ready((boxes_cf, scores_cf))
    assert boxes_cf.shape == (B, D_BOX, N)
    assert scores_cf.shape == (B, NUM_CLASSES, N)
    topk_vals, topk_idx = jax.lax.top_k(scores_cf, k=128)   # per-class top-k over points
    jax.block_until_ready((topk_vals, topk_idx))
    assert topk_vals.shape == (B, NUM_CLASSES, 128)

    # ---- bf16 input/weight/output path (recommended on v5e/v6e/v7x) ----
    boxes16, scores16 = proposal_layer(features, w1, b1, w2, b2, use_bf16=True)
    jax.block_until_ready((boxes16, scores16))
    assert boxes16.dtype == jnp.bfloat16 and scores16.dtype == jnp.bfloat16
    assert jnp.allclose(boxes16, ref_boxes, atol=1e-1, rtol=1e-1)
    assert jnp.allclose(scores16, ref_scores, atol=1e-1, rtol=1e-1)

    # ---- ragged N, B==1 (exercises zero-padding and the >=2-tile megacore split) ----
    Nr = 1000
    feats_r = jax.random.normal(k_feat2, (1, C_IN, Nr), dtype=jnp.float32)
    ref_b_r, ref_s_r = _reference(feats_r, w1, b1, w2, b2)
    b_r, s_r = proposal_layer(feats_r, w1, b1, w2, b2)
    jax.block_until_ready((b_r, s_r))
    assert b_r.shape == (1, Nr, NUM_CLASSES, BOX_DOF)
    assert s_r.shape == (1, Nr, NUM_CLASSES)
    assert jnp.allclose(b_r, ref_b_r, atol=1e-5, rtol=1e-5)
    assert jnp.allclose(s_r, ref_s_r, atol=1e-5, rtol=1e-5)

    # TODO(synk): ProposalLayer.inference() top-k selection/gather of boxes is
    # left to JAX glue (jax.lax.top_k + take_along_axis on the channels-first
    # outputs); only the forward() hot path is implemented in the kernel.
    print("KERNEL_OK")
</pallas_src>

<mosaic_0001>
module attributes {stable_mosaic.version = 11 : i64} {
  func.func @proposal_kernel(%arg0: i32, %arg1: i32, %arg2: memref<1x32x2048xf32, #tpu.memory_space<vmem>>, %arg3: memref<32x32xf32, #tpu.memory_space<vmem>>, %arg4: memref<32x1xf32, #tpu.memory_space<vmem>>, %arg5: memref<32x32xf32, #tpu.memory_space<vmem>>, %arg6: memref<32x1xf32, #tpu.memory_space<vmem>>, %arg7: memref<1x32x2048xf32, #tpu.memory_space<vmem>>) attributes {dimension_semantics = [#tpu.dimension_semantics<parallel>, #tpu.dimension_semantics<parallel>], iteration_bounds = array<i64: 2, 1>, scalar_prefetch = 0 : i64, scratch_operands = 0 : i64, tpu.core_type = #tpu.core_type<tc>, window_params = [{transform_indices = @transform_0, window_bounds = array<i64: 1, 32, 2048>}, {pipeline_mode = #tpu.pipeline_mode<synchronous>, transform_indices = @transform_1, window_bounds = array<i64: 32, 32>}, {pipeline_mode = #tpu.pipeline_mode<synchronous>, transform_indices = @transform_2, window_bounds = array<i64: 32, 1>}, {pipeline_mode = #tpu.pipeline_mode<synchronous>, transform_indices = @transform_3, window_bounds = array<i64: 32, 32>}, {pipeline_mode = #tpu.pipeline_mode<synchronous>, transform_indices = @transform_4, window_bounds = array<i64: 32, 1>}, {transform_indices = @transform_5, window_bounds = array<i64: 1, 32, 2048>}]} {
    %c0 = arith.constant 0 : index
    %c0_0 = arith.constant 0 : index
    %c0_1 = arith.constant 0 : index
    %0 = vector.load %arg2[%c0, %c0_0, %c0_1] : memref<1x32x2048xf32, #tpu.memory_space<vmem>>, vector<1x32x2048xf32>
    %1 = vector.shape_cast %0 : vector<1x32x2048xf32> to vector<32x2048xf32>
    %c0_2 = arith.constant 0 : index
    %c0_3 = arith.constant 0 : index
    %2 = vector.load %arg3[%c0_2, %c0_3] : memref<32x32xf32, #tpu.memory_space<vmem>>, vector<32x32xf32>
    %cst = arith.constant dense<0.000000e+00> : vector<32x2048xf32>
    %3 = tpu.matmul %2, %1, %cst {dimension_numbers = #tpu.dot_dimension_numbers<[1], [0], [0], [1], [0, 0, 1, 1], [], []>} : vector<32x32xf32>, vector<32x2048xf32>, vector<32x2048xf32> -> vector<32x2048xf32>
    %c0_4 = arith.constant 0 : index
    %c0_5 = arith.constant 0 : index
    %4 = vector.load %arg4[%c0_4, %c0_5] : memref<32x1xf32, #tpu.memory_space<vmem>>, vector<32x1xf32>
    %5 = vector.broadcast %4 : vector<32x1xf32> to vector<32x2048xf32>
    %6 = arith.addf %3, %5 : vector<32x2048xf32>
    %cst_6 = arith.constant 0.000000e+00 : f32
    %7 = vector.broadcast %cst_6 : f32 to vector<32x2048xf32>
    %8 = arith.maximumf %6, %7 : vector<32x2048xf32>
    %c0_7 = arith.constant 0 : index
    %c0_8 = arith.constant 0 : index
    %9 = vector.load %arg5[%c0_7, %c0_8] : memref<32x32xf32, #tpu.memory_space<vmem>>, vector<32x32xf32>
    %cst_9 = arith.constant dense<0.000000e+00> : vector<32x2048xf32>
    %10 = tpu.matmul %9, %8, %cst_9 {dimension_numbers = #tpu.dot_dimension_numbers<[1], [0], [0], [1], [0, 0, 1, 1], [], []>} : vector<32x32xf32>, vector<32x2048xf32>, vector<32x2048xf32> -> vector<32x2048xf32>
    %c0_10 = arith.constant 0 : index
    %c0_11 = arith.constant 0 : index
    %11 = vector.load %arg6[%c0_10, %c0_11] : memref<32x1xf32, #tpu.memory_space<vmem>>, vector<32x1xf32>
    %12 = vector.broadcast %11 : vector<32x1xf32> to vector<32x2048xf32>
    %13 = arith.addf %10, %12 : vector<32x2048xf32>
    %14 = vector.extract_strided_slice %13 {offsets = [24, 0], sizes = [8, 2048], strides = [1, 1]} : vector<32x2048xf32> to vector<8x2048xf32>
    %15 = tpu.iota {dimensions = array<i32: 0>} : vector<8x2048xi32>
    %c3_i32 = arith.constant 3 : i32
    %16 = vector.broadcast %c3_i32 : i32 to vector<8x2048xi32>
    %17 = arith.cmpi slt, %15, %16 : vector<8x2048xi32>
    %cst_12 = arith.constant 0xFF800000 : f32
    %18 = vector.broadcast %cst_12 : f32 to vector<8x2048xf32>
    %19 = arith.select %17, %14, %18 : vector<8x2048xi1>, vector<8x2048xf32>
    %cst_13 = arith.constant dense<0xFF800000> : vector<2048xf32>
    %20 = vector.multi_reduction <maximumf>, %19, %cst_13 [0] : vector<8x2048xf32> to vector<2048xf32>
    %21 = vector.shape_cast %20 : vector<2048xf32> to vector<1x2048xf32>
    %22 = vector.broadcast %21 : vector<1x2048xf32> to vector<8x2048xf32>
    %23 = arith.subf %14, %22 : vector<8x2048xf32>
    %24 = math.exp %23 : vector<8x2048xf32>
    %cst_14 = arith.constant 0.000000e+00 : f32
    %25 = vector.broadcast %cst_14 : f32 to vector<8x2048xf32>
    %26 = arith.select %17, %24, %25 : vector<8x2048xi1>, vector<8x2048xf32>
    %cst_15 = arith.constant dense<0.000000e+00> : vector<2048xf32>
    %27 = vector.multi_reduction <add>, %26, %cst_15 [0] : vector<8x2048xf32> to vector<2048xf32>
    %28 = vector.shape_cast %27 : vector<2048xf32> to vector<1x2048xf32>
    %29 = tpu.reciprocal %28 : vector<1x2048xf32> -> vector<1x2048xf32>
    %30 = vector.broadcast %29 : vector<1x2048xf32> to vector<8x2048xf32>
    %31 = arith.mulf %26, %30 : vector<8x2048xf32>
    %32 = vector.extract_strided_slice %13 {offsets = [0, 0], sizes = [24, 2048], strides = [1, 1]} : vector<32x2048xf32> to vector<24x2048xf32>
    %33 = tpu.concatenate %32, %31 in 0 : vector<24x2048xf32>, vector<8x2048xf32> -> vector<32x2048xf32>
    %c0_16 = arith.constant 0 : index
    %c0_17 = arith.constant 0 : index
    %c0_18 = arith.constant 0 : index
    %34 = vector.load %arg7[%c0_16, %c0_17, %c0_18] : memref<1x32x2048xf32, #tpu.memory_space<vmem>>, vector<1x32x2048xf32>
    %35 = vector.shape_cast %34 : vector<1x32x2048xf32> to vector<32x2048xf32>
    %36 = vector.shape_cast %33 : vector<32x2048xf32> to vector<1x32x2048xf32>
    tpu.vector_store %arg7[%c0_16, %c0_17, %c0_18], %36 {strides = array<i32>} : memref<1x32x2048xf32, #tpu.memory_space<vmem>>, vector<1x32x2048xf32>,
    return
  }
  func.func @transform_0(%arg0: i32, %arg1: i32) -> (i32, i32, i32) {
    %c0_i32 = arith.constant 0 : i32
    %c0_i32_0 = arith.constant 0 : i32
    return %arg0, %c0_i32, %arg1 : i32, i32, i32
  }
  func.func @transform_1(%arg0: i32, %arg1: i32) -> (i32, i32) {
    %c0_i32 = arith.constant 0 : i32
    %c0_i32_0 = arith.constant 0 : i32
    %c0_i32_1 = arith.constant 0 : i32
    return %c0_i32, %c0_i32_0 : i32, i32
  }
  func.func @transform_2(%arg0: i32, %arg1: i32) -> (i32, i32) {
    %c0_i32 = arith.constant 0 : i32
    %c0_i32_0 = arith.constant 0 : i32
    %c0_i32_1 = arith.constant 0 : i32
    return %c0_i32, %c0_i32_0 : i32, i32
  }
  func.func @transform_3(%arg0: i32, %arg1: i32) -> (i32, i32) {
    %c0_i32 = arith.constant 0 : i32
    %c0_i32_0 = arith.constant 0 : i32
    %c0_i32_1 = arith.constant 0 : i32
    return %c0_i32, %c0_i32_0 : i32, i32
  }
  func.func @transform_4(%arg0: i32, %arg1: i32) -> (i32, i32) {
    %c0_i32 = arith.constant 0 : i32
    %c0_i32_0 = arith.constant 0 : i32
    %c0_i32_1 = arith.constant 0 : i32
    return %c0_i32, %c0_i32_0 : i32, i32
  }
  func.func @transform_5(%arg0: i32, %arg1: i32) -> (i32, i32, i32) {
    %c0_i32 = arith.constant 0 : i32
    %c0_i32_0 = arith.constant 0 : i32
    return %arg0, %c0_i32, %arg1 : i32, i32, i32
  }
}

</mosaic_0001>

<llo_original>
// kernel: tpu_custom_call.1
$region0: #{tpu_custom_call.1}
  #allocation0 [shape = 'u32[]', space=smem, size = 0x4, offset = 0x4, fixed_abs, tag = 'smem constant byte address 0x4 - core index']
  #allocation1 [shape = 'u32[144,128]{1,0:T(1,128)}', space=vmem, size = 0x12000, scoped, tag = 'internal scratch']
  %s0 = inlined_call_operand.hbm [shape: f32[2,32,2048], index: 0, kind: input, shape index: {}]
  %s1 = inlined_call_operand.vmem [shape: f32[32,32], index: 1, kind: input, shape index: {}]
  %s2 = inlined_call_operand.vmem [shape: f32[32,1], index: 2, kind: input, shape index: {}]
  %s3 = inlined_call_operand.vmem [shape: f32[32,32], index: 3, kind: input, shape index: {}]
  %s4 = inlined_call_operand.vmem [shape: f32[32,1], index: 4, kind: input, shape index: {}]
  %s5 = inlined_call_operand.hbm [shape: f32[2,32,2048], index: 5, kind: output, shape index: {}]
  %s6 = sld [smem:[#allocation0]]
  $region57: #{tpu_custom_call.1} parent=0
    _
  %s8 = ssub.s32 1, %s6
  %s9 = scalar_select 0, %s8, %s6
  $region1: #{tpu_custom_call.1} parent=0
    #allocation2 [shape = 'u8[524288]{0}', space=vmem, size = 0x80000, scoped, tag = 'input window, operand 0']
    #allocation3 [shape = 's32[2]{0}', space=sflag, size = 0x8, scoped, tag = 'scoped memory for tpu_custom_call.1']
    #allocation4 [shape = 's32[2]{0}', space=sflag, size = 0x8, scoped, tag = 'scoped memory for tpu_custom_call.1']
    #allocation5 [shape = 'u8[524288]{0}', space=vmem, size = 0x80000, scoped, tag = 'output window, operand 0']
    %10 = vsyncpa [#allocation3], 0
    %s11 = scalar_lea.sflag [#allocation3], 1
    %12 = vsyncpa %s11, 0
    %13 = vsyncpa [#allocation4], 0
    %s14 = scalar_lea.sflag [#allocation4], 1
    %15 = vsyncpa %s14, 0
    loop: start=0, step=1, limit=4
    $region2: #{tpu_custom_call.1} parent=1 // loop_pre_header
      _
    $region3: #{tpu_custom_call.1} parent=1 // loop_header
      %s17 = sphi 0, %s21
      %p18 = scmp.ge.s32.totalorder %s17, 4
      %s24 = sphi 0, %s36
      %s25 = sphi 0, %s32
      %s26 = sphi 0, %s24
      %s27 = sphi 0, %s25
      %s28 = sphi 0, %s26
      %s29 = sphi 0, %s27
      %s41 = sphi 0, %s43
      %s44 = sphi 0, %s41
      %s45 = sphi 0, %s44
      %s61 = sphi 0, %s45
      %s65 = sphi 0, %s65
      %s67 = sphi 0, %s65
      %s68 = sphi 0, %s67
      %s82 = sphi 0, %s68
      %s86 = sphi 0, %s86
      %s88 = sphi 0, %s86
      %s89 = sphi 0, %s88
      %s103 = sphi 0, %s89
      %s107 = sphi 0, %s107
      %s109 = sphi 0, %s107
      %s110 = sphi 0, %s109
      %s124 = sphi 0, %s110
      %s128 = sphi 0, %s128
      %s130 = sphi 0, %s128
      %s131 = sphi 0, %s130
      %s145 = sphi 0, %s131
      %s153 = sphi 0, %s155
      %s156 = sphi 0, %s153
      %s157 = sphi 0, %s156
      %s173 = sphi 0, %s157
    $region4: #{tpu_custom_call.1} parent=1 // loop_header_branch
      %20 = sbr.rel (%p18) target = $region8
    $region5: #{tpu_custom_call.1} parent=1 // loop_body
      %s22 = ssub.s32 %s17, 1
      %s23 = ssub.s32 %s17, 2
      %s30 = sadd.s32 1, %s25
      %p31 = scmp.ge.s32.totalorder %s30, 1
      %s32 = scalar_select %p31, 0, %s30
      %s33 = sadd.s32 1, %s24
      %s34 = scalar_select %p31, %s33, %s24
      %p35 = scmp.ge.s32.totalorder %s34, 2
      %s36 = scalar_select %p35, 0, %s34
      %s37 = ssub.s32 %s24, %s36
      %s38 = ssub.s32 %s25, %s32
      %s39 = sor.u32 %s37, %s38
      %p40 = scmp.eq.s32.totalorder %s39, 0
      %s42 = sadd.s32 %s41, 1
      %s43 = scalar_select %p40, %s41, %s42
      %p46 = pneg %p40
      %p47 = scmp.eq.s32.totalorder %s17, 1
      %p48 = por %p46, %p47
      %p49 = scmp.ne.s32.totalorder %s41, %s44
      %p50 = scmp.eq.s32.totalorder %s17, 0
      %p51 = por %p49, %p50
      %p52 = scmp.ne.s32.totalorder %s41, %s44
      %p53 = scmp.eq.s32.totalorder %s22, 1
      %p54 = por %p52, %p53
      %p55 = scmp.ne.s32.totalorder %s44, %s45
      %p56 = scmp.eq.s32.totalorder %s22, 0
      %p57 = por %p55, %p56
      %p58 = scmp.ne.s32.totalorder %s44, %s45
      %p59 = scmp.eq.s32.totalorder %s23, 1
      %p60 = por %p58, %p59
      %p62 = scmp.ne.s32.totalorder %s45, %s61
      %p63 = scmp.eq.s32.totalorder %s23, 0
      %p64 = por %p62, %p63
      %s66 = sadd.s32 %s65, 1
      %p69 = scmp.eq.s32.totalorder %s17, 1
      %p70 = scmp.ne.s32.totalorder %s65, %s67
      %p71 = scmp.eq.s32.totalorder %s17, 0
      %p72 = por %p70, %p71
      %p73 = scmp.ne.s32.totalorder %s65, %s67
      %p74 = scmp.eq.s32.totalorder %s22, 1
      %p75 = por %p73, %p74
      %p76 = scmp.ne.s32.totalorder %s67, %s68
      %p77 = scmp.eq.s32.totalorder %s22, 0
      %p78 = por %p76, %p77
      %p79 = scmp.ne.s32.totalorder %s67, %s68
      %p80 = scmp.eq.s32.totalorder %s23, 1
      %p81 = por %p79, %p80
      %p83 = scmp.ne.s32.totalorder %s68, %s82
      %p84 = scmp.eq.s32.totalorder %s23, 0
      %p85 = por %p83, %p84
      %s87 = sadd.s32 %s86, 1
      %p90 = scmp.eq.s32.totalorder %s17, 1
      %p91 = scmp.ne.s32.totalorder %s86, %s88
      %p92 = scmp.eq.s32.totalorder %s17, 0
      %p93 = por %p91, %p92
      %p94 = scmp.ne.s32.totalorder %s86, %s88
      %p95 = scmp.eq.s32.totalorder %s22, 1
      %p96 = por %p94, %p95
      %p97 = scmp.ne.s32.totalorder %s88, %s89
      %p98 = scmp.eq.s32.totalorder %s22, 0
      %p99 = por %p97, %p98
      %p100 = scmp.ne.s32.totalorder %s88, %s89
      %p101 = scmp.eq.s32.totalorder %s23, 1
      %p102 = por %p100, %p101
      %p104 = scmp.ne.s32.totalorder %s89, %s103
      %p105 = scmp.eq.s32.totalorder %s23, 0
      %p106 = por %p104, %p105
      %s108 = sadd.s32 %s107, 1
      %p111 = scmp.eq.s32.totalorder %s17, 1
      %p112 = scmp.ne.s32.totalorder %s107, %s109
      %p113 = scmp.eq.s32.totalorder %s17, 0
      %p114 = por %p112, %p113
      %p115 = scmp.ne.s32.totalorder %s107, %s109
      %p116 = scmp.eq.s32.totalorder %s22, 1
      %p117 = por %p115, %p116
      %p118 = scmp.ne.s32.totalorder %s109, %s110
      %p119 = scmp.eq.s32.totalorder %s22, 0
      %p120 = por %p118, %p119
      %p121 = scmp.ne.s32.totalorder %s109, %s110
      %p122 = scmp.eq.s32.totalorder %s23, 1
      %p123 = por %p121, %p122
      %p125 = scmp.ne.s32.totalorder %s110, %s124
      %p126 = scmp.eq.s32.totalorder %s23, 0
      %p127 = por %p125, %p126
      %s129 = sadd.s32 %s128, 1
      %p132 = scmp.eq.s32.totalorder %s17, 1
      %p133 = scmp.ne.s32.totalorder %s128, %s130
      %p134 = scmp.eq.s32.totalorder %s17, 0
      %p135 = por %p133, %p134
      %p136 = scmp.ne.s32.totalorder %s128, %s130
      %p137 = scmp.eq.s32.totalorder %s22, 1
      %p138 = por %p136, %p137
      %p139 = scmp.ne.s32.totalorder %s130, %s131
      %p140 = scmp.eq.s32.totalorder %s22, 0
      %p141 = por %p139, %p140
      %p142 = scmp.ne.s32.totalorder %s130, %s131
      %p143 = scmp.eq.s32.totalorder %s23, 1
      %p144 = por %p142, %p143
      %p146 = scmp.ne.s32.totalorder %s131, %s145
      %p147 = scmp.eq.s32.totalorder %s23, 0
      %p148 = por %p146, %p147
      %s149 = ssub.s32 %s24, %s36
      %s150 = ssub.s32 %s25, %s32
      %s151 = sor.u32 %s149, %s150
      %p152 = scmp.eq.s32.totalorder %s151, 0
      %s154 = sadd.s32 %s153, 1
      %s155 = scalar_select %p152, %s153, %s154
      %p158 = pneg %p152
      %p159 = scmp.eq.s32.totalorder %s17, 1
      %p160 = por %p158, %p159
      %p161 = scmp.ne.s32.totalorder %s153, %s156
      %p162 = scmp.eq.s32.totalorder %s17, 0
      %p163 = por %p161, %p162
      %p164 = scmp.ne.s32.totalorder %s153, %s156
      %p165 = scmp.eq.s32.totalorder %s22, 1
      %p166 = por %p164, %p165
      %p167 = scmp.ne.s32.totalorder %s156, %s157
      %p168 = scmp.eq.s32.totalorder %s22, 0
      %p169 = por %p167, %p168
      %p170 = scmp.ne.s32.totalorder %s156, %s157
      %p171 = scmp.eq.s32.totalorder %s23, 1
      %p172 = por %p170, %p171
      %p174 = scmp.ne.s32.totalorder %s157, %s173
      %p175 = scmp.eq.s32.totalorder %s23, 0
      %p176 = por %p174, %p175
      %p177 = scmp.le.s32.totalorder 1, %s17
      %p178 = scmp.lt.s32.totalorder %s17, 3
      %p179 = pnand %p177, %p178
      %p180 = pneg %p179
      // Predicated region
      $region9: #{tpu_custom_call.1} parent=5 // pred_check
        _
      $region10: #{tpu_custom_call.1} parent=5 // pred_check_branch
        %182 = sbr.rel (%p179) target = $region12
      $region11: #{tpu_custom_call.1} parent=5 // pred_region
        %s183 = ssub.s32 %s17, 1
        // Predicated region
        $region13: #{tpu_custom_call.1} parent=11 // pred_check
          %p184 = pneg %p78
        $region14: #{tpu_custom_call.1} parent=11 // pred_check_branch
          %186 = sbr.rel (%p184) target = $region16
        $region15: #{tpu_custom_call.1} parent=11 // pred_region
          _
        $region16: #{tpu_custom_call.1} parent=11 // pred_fallthru
          _
        // Predicated region
        $region17: #{tpu_custom_call.1} parent=11 // pred_check
          %p187 = pneg %p99
        $region18: #{tpu_custom_call.1} parent=11 // pred_check_branch
          %189 = sbr.rel (%p187) target = $region20
        $region19: #{tpu_custom_call.1} parent=11 // pred_region
          _
        $region20: #{tpu_custom_call.1} parent=11 // pred_fallthru
          _
        // Predicated region
        $region21: #{tpu_custom_call.1} parent=11 // pred_check
          %p190 = pneg %p120
        $region22: #{tpu_custom_call.1} parent=11 // pred_check_branch
          %192 = sbr.rel (%p190) target = $region24
        $region23: #{tpu_custom_call.1} parent=11 // pred_region
          _
        $region24: #{tpu_custom_call.1} parent=11 // pred_fallthru
          _
        // Predicated region
        $region25: #{tpu_custom_call.1} parent=11 // pred_check
          %p193 = pneg %p141
        $region26: #{tpu_custom_call.1} parent=11 // pred_check_branch
          %195 = sbr.rel (%p193) target = $region28
        $region27: #{tpu_custom_call.1} parent=11 // pred_region
          _
        $region28: #{tpu_custom_call.1} parent=11 // pred_fallthru
          _
      $region12: #{tpu_custom_call.1} parent=5 // pred_fallthru
        _
      %p196 = scmp.lt.s32.totalorder %s17, 2
      // Predicated region
      $region29: #{tpu_custom_call.1} parent=5 // pred_check
        %p197 = pneg %p196
      $region30: #{tpu_custom_call.1} parent=5 // pred_check_branch
        %199 = sbr.rel (%p197) target = $region32
      $region31: #{tpu_custom_call.1} parent=5 // pred_region
        // Predicated region
        $region33: #{tpu_custom_call.1} parent=31 // pred_check
          %p200 = pneg %p51
        $region34: #{tpu_custom_call.1} parent=31 // pred_check_branch
          %202 = sbr.rel (%p200) target = $region36
        $region35: #{tpu_custom_call.1} parent=31 // pred_region
          %s203 = sand.u32 %s41, 1
          %s204 = scalar_lea.sflag [#allocation3], %s203
          %s205 = sand.u32 %s41, 1
          %s206 = smul.addr %s205, 512
          %s207 = scalar_lea.vmem [#allocation2], %s206
          %s208 = smul.u32 16, %s25
          %s210 = ssub.s32 8192, 8192
          %211 = vsyncadd %s204, %s210
          %s212 = smul.addr %s24, 64
          %s213 = sadd.s32 %s208, %s212
          %s214 = smul.addr %s213, 128
          %s215 = scalar_lea.hbm %s0, %s214
          %s216 = sshll.u32 %s207, 4
          %s217 = int_to_ptr.vmem [resolvable:$true] %s216
          %222 = dma.hbm_to_vmem [thread:$0]  %s215, 8192, %s217, %s204, 2048, 2048, 128
        $region36: #{tpu_custom_call.1} parent=31 // pred_fallthru
          _
      $region32: #{tpu_custom_call.1} parent=5 // pred_fallthru
        _
      %p223 = scmp.le.s32.totalorder 1, %s17
      %p224 = scmp.lt.s32.totalorder %s17, 3
      %p225 = pnand %p223, %p224
      %p226 = pneg %p225
      // Predicated region
      $region37: #{tpu_custom_call.1} parent=5 // pred_check
        _
      $region38: #{tpu_custom_call.1} parent=5 // pred_check_branch
        %228 = sbr.rel (%p225) target = $region40
      $region39: #{tpu_custom_call.1} parent=5 // pred_region
        %s229 = ssub.s32 %s17, 1
        %s230 = sand.u32 %s44, 1
        %s231 = scalar_lea.sflag [#allocation3], %s230
        %s232 = sand.u32 %s44, 1
        %s233 = smul.addr %s232, 512
        %s234 = scalar_lea.vmem [#allocation2], %s233
        // Predicated region
        $region41: #{tpu_custom_call.1} parent=39 // pred_check
          %p235 = pneg %p57
        $region42: #{tpu_custom_call.1} parent=39 // pred_check_branch
          %237 = sbr.rel (%p235) target = $region44
        $region43: #{tpu_custom_call.1} parent=39 // pred_region
          %238 = dma.done %s231, 8192
        $region44: #{tpu_custom_call.1} parent=39 // pred_fallthru
          _
        %s239 = sand.u32 %s44, 1
        %s240 = scalar_lea.sflag [#allocation3], %s239
        %s241 = sand.u32 %s44, 1
        %s242 = smul.addr %s241, 512
        %s243 = scalar_lea.vmem [#allocation2], %s242
        %p244 = pneg %p57
        %p245 = pneg %p54
        %p246 = pneg %p78
        %p247 = pneg %p75
        %p248 = pneg %p99
        %p249 = pneg %p96
        %p250 = pneg %p120
        %p251 = pneg %p117
        %p252 = pneg %p141
        %p253 = pneg %p138
        %p254 = pneg %p169
        %p255 = pneg %p166
        %s256 = sand.u32 %s156, 1
        %s257 = scalar_lea.sflag [#allocation4], %s256
        %s258 = sand.u32 %s156, 1
        %s259 = smul.addr %s258, 512
        %s260 = scalar_lea.vmem [#allocation5], %s259
        %s261 = smul.u32 16, %s27
        %s262 = smul.u32 16, %s27
        %v263 = vld [vmem:[%s234] sm:$0xff]
        %v264 = vld [vmem:[%s234 + $0x8] sm:$0xff]
        %v265 = vld [vmem:[%s234 + $0x10] sm:$0xff]
        %v266 = vld [vmem:[%s234 + $0x18] sm:$0xff]
        %v267 = vld [vmem:[%s234 + $0x20] sm:$0xff]
        %v268 = vld [vmem:[%s234 + $0x28] sm:$0xff]
        %v269 = vld [vmem:[%s234 + $0x30] sm:$0xff]
        %v270 = vld [vmem:[%s234 + $0x38] sm:$0xff]
        %v271 = vld [vmem:[%s234 + $0x40] sm:$0xff]
        %v272 = vld [vmem:[%s234 + $0x48] sm:$0xff]
        %v273 = vld [vmem:[%s234 + $0x50] sm:$0xff]
        %v274 = vld [vmem:[%s234 + $0x58] sm:$0xff]
        %v275 = vld [vmem:[%s234 + $0x60] sm:$0xff]
        %v276 = vld [vmem:[%s234 + $0x68] sm:$0xff]
        %v277 = vld [vmem:[%s234 + $0x70] sm:$0xff]
        %v278 = vld [vmem:[%s234 + $0x78] sm:$0xff]
        %v279 = vld [vmem:[%s234 + $0x80] sm:$0xff]
        %v280 = vld [vmem:[%s234 + $0x88] sm:$0xff]
        %v281 = vld [vmem:[%s234 + $0x90] sm:$0xff]
        %v282 = vld [vmem:[%s234 + $0x98] sm:$0xff]
        %v283 = vld [vmem:[%s234 + $0xa0] sm:$0xff]
        %v284 = vld [vmem:[%s234 + $0xa8] sm:$0xff]
        %v285 = vld [vmem:[%s234 + $0xb0] sm:$0xff]
        %v286 = vld [vmem:[%s234 + $0xb8] sm:$0xff]
        %v287 = vld [vmem:[%s234 + $0xc0] sm:$0xff]
        %v288 = vld [vmem:[%s234 + $0xc8] sm:$0xff]
        %v289 = vld [vmem:[%s234 + $0xd0] sm:$0xff]
        %v290 = vld [vmem:[%s234 + $0xd8] sm:$0xff]
        %v291 = vld [vmem:[%s234 + $0xe0] sm:$0xff]
        %v292 = vld [vmem:[%s234 + $0xe8] sm:$0xff]
        %v293 = vld [vmem:[%s234 + $0xf0] sm:$0xff]
        %v294 = vld [vmem:[%s234 + $0xf8] sm:$0xff]
        %v295 = vld [vmem:[%s234 + $0x100] sm:$0xff]
        %v296 = vld [vmem:[%s234 + $0x108] sm:$0xff]
        %v297 = vld [vmem:[%s234 + $0x110] sm:$0xff]
        %v298 = vld [vmem:[%s234 + $0x118] sm:$0xff]
        %v299 = vld [vmem:[%s234 + $0x120] sm:$0xff]
        %v300 = vld [vmem:[%s234 + $0x128] sm:$0xff]
        %v301 = vld [vmem:[%s234 + $0x130] sm:$0xff]
        %v302 = vld [vmem:[%s234 + $0x138] sm:$0xff]
        %v303 = vld [vmem:[%s234 + $0x140] sm:$0xff]
        %v304 = vld [vmem:[%s234 + $0x148] sm:$0xff]
        %v305 = vld [vmem:[%s234 + $0x150] sm:$0xff]
        %v306 = vld [vmem:[%s234 + $0x158] sm:$0xff]
        %v307 = vld [vmem:[%s234 + $0x160] sm:$0xff]
        %v308 = vld [vmem:[%s234 + $0x168] sm:$0xff]
        %v309 = vld [vmem:[%s234 + $0x170] sm:$0xff]
        %v310 = vld [vmem:[%s234 + $0x178] sm:$0xff]
        %v311 = vld [vmem:[%s234 + $0x180] sm:$0xff]
        %v312 = vld [vmem:[%s234 + $0x188] sm:$0xff]
        %v313 = vld [vmem:[%s234 + $0x190] sm:$0xff]
        %v314 = vld [vmem:[%s234 + $0x198] sm:$0xff]
        %v315 = vld [vmem:[%s234 + $0x1a0] sm:$0xff]
        %v316 = vld [vmem:[%s234 + $0x1a8] sm:$0xff]
        %v317 = vld [vmem:[%s234 + $0x1b0] sm:$0xff]
        %v318 = vld [vmem:[%s234 + $0x1b8] sm:$0xff]
        %v319 = vld [vmem:[%s234 + $0x1c0] sm:$0xff]
        %v320 = vld [vmem:[%s234 + $0x1c8] sm:$0xff]
        %v321 = vld [vmem:[%s234 + $0x1d0] sm:$0xff]
        %v322 = vld [vmem:[%s234 + $0x1d8] sm:$0xff]
        %v323 = vld [vmem:[%s234 + $0x1e0] sm:$0xff]
        %v324 = vld [vmem:[%s234 + $0x1e8] sm:$0xff]
        %v325 = vld [vmem:[%s234 + $0x1f0] sm:$0xff]
        %v326 = vld [vmem:[%s234 + $0x1f8] sm:$0xff]
        %v327 = vld [vmem:[%s1] sm:$0xff]
        %v328 = vld [vmem:[%s1 + $0x8] sm:$0xff]
        %v329 = vld [vmem:[%s1 + $0x10] sm:$0xff]
        %v330 = vld [vmem:[%s1 + $0x18] sm:$0xff]
        %v331 = vld [vmem:[%s2] sm:$0xff]
        %v332 = vld [vmem:[%s2 + $0x8] sm:$0xff]
        %v333 = vld [vmem:[%s2 + $0x10] sm:$0xff]
        %v334 = vld [vmem:[%s2 + $0x18] sm:$0xff]
        %336 = vset.pattern.permute.xlu0 0
        %337 = vperm.xlu0 %336, %v331
        %v338 = vpop.permute.xlu0 %337
        %341 = vset.pattern.permute.xlu0 0
        %342 = vperm.xlu0 %341, %v332
        %v343 = vpop.permute.xlu0 %342
        %346 = vset.pattern.permute.xlu0 0
        %347 = vperm.xlu0 %346, %v333
        %v348 = vpop.permute.xlu0 %347
        %351 = vset.pattern.permute.xlu0 0
        %352 = vperm.xlu0 %351, %v334
        %v353 = vpop.permute.xlu0 %352
        %vm355 = vcmask 261120
        %v357 = vsel %vm355, %v327, 0
        %v360 = vsel %vm355, %v328, 0
        %v363 = vsel %vm355, %v329, 0
        %v366 = vsel %vm355, %v330, 0
        %368 = vmatprep.subr.mxu0 0.0
        %369 = vmatpush1.msra.mxu0 0.0
        %370 = vmatprep.subr.mxu0 0.0
        %371 = vmatpush1.msra.mxu0 0.0
        %372 = vmatprep.subr.mxu0 0.0
        %373 = vmatpush1.msra.mxu0 0.0
        %374 = vmatprep.subr.mxu0 0.0
        %375 = vmatpush1.msra.mxu0 0.0
        %376 = vmatprep.subr.mxu0 0.0
        %377 = vmatpush1.msra.mxu0 0.0
        %378 = vmatprep.subr.mxu0 0.0
        %379 = vmatpush1.msra.mxu0 0.0
        %380 = vmatprep.subr.mxu0 0.0
        %381 = vmatpush1.msra.mxu0 0.0
        %382 = vmatprep.subr.mxu0 0.0
        %383 = vmatpush1.msra.mxu0 0.0
        %384 = vmatprep.subr.mxu0 0.0
        %385 = vmatpush1.msra.mxu0 0.0
        %386 = vmatprep.subr.mxu0 0.0
        %387 = vmatpush1.msra.mxu0 0.0
        %388 = vmatprep.subr.mxu0 0.0
        %389 = vmatpush1.msra.mxu0 0.0
        %390 = vmatprep.subr.mxu0 0.0
        %391 = vmatpush1.msra.mxu0 0.0
        %392 = vmatprep.subr.mxu0 %v312
        %393 = vmatpush1.msra.mxu0 %v311
        %394 = vmatprep.subr.mxu0 %v296
        %395 = vmatpush1.msra.mxu0 %v295
        %396 = vmatprep.subr.mxu0 %v280
        %397 = vmatpush1.msra.mxu0 %v279
        %398 = vmatprep.subr.mxu0 %v264
        %399 = vmatpush1.msra.mxu0 %v263
        %400 = vmatprep.subr.mxu0 0.0
        %401 = vmatpush2.msra.mxu0 0.0
        %402 = vmatprep.subr.mxu0 0.0
        %403 = vmatpush2.msra.mxu0 0.0
        %404 = vmatprep.subr.mxu0 0.0
        %405 = vmatpush2.msra.mxu0 0.0
        %406 = vmatprep.subr.mxu0 0.0
        %407 = vmatpush2.msra.mxu0 0.0
        %408 = vmatprep.subr.mxu0 0.0
        %409 = vmatpush2.msra.mxu0 0.0
        %410 = vmatprep.subr.mxu0 0.0
        %411 = vmatpush2.msra.mxu0 0.0
        %412 = vmatprep.subr.mxu0 0.0
        %413 = vmatpush2.msra.mxu0 0.0
        %414 = vmatprep.subr.mxu0 0.0
        %415 = vmatpush2.msra.mxu0 0.0
        %416 = vmatprep.subr.mxu0 0.0
        %417 = vmatpush2.msra.mxu0 0.0
        %418 = vmatprep.subr.mxu0 0.0
        %419 = vmatpush2.msra.mxu0 0.0
        %420 = vmatprep.subr.mxu0 0.0
        %421 = vmatpush2.msra.mxu0 0.0
        %422 = vmatprep.subr.mxu0 0.0
        %423 = vmatpush2.msra.mxu0 0.0
        %424 = vmatprep.subr.mxu0 0.0
        %425 = vmatpush2.msra.mxu0 0.0
        %426 = vmatprep.subr.mxu0 0.0
        %427 = vmatpush2.msra.mxu0 0.0
        %428 = vmatprep.subr.mxu0 0.0
        %429 = vmatpush2.msra.mxu0 0.0
        %430 = vmatprep.subr.mxu0 0.0
        %431 = vmatpush2.msra.mxu0 0.0
        %432 = vmatprep.mubr.f32.mxu0 0.0
        %433 = vmatmul.mubr.f32.gmra.mxu0 %v357
        %v434 = vpop.f32.mrf.mxu0
        %v435 = vadd.f32 %v338, %v434
        %v436 = vpop.f32.mrf.mxu0
        %v437 = vadd.f32 %v338, %v436
        %438 = vmatprep.mubr.f32.mxu0 0.0
        %439 = vmatmul.mubr.f32.gmra.mxu0 %v360
        %v440 = vpop.f32.mrf.mxu0
        %v441 = vadd.f32 %v343, %v440
        %v442 = vpop.f32.mrf.mxu0
        %v443 = vadd.f32 %v343, %v442
        %444 = vmatprep.mubr.f32.mxu0 0.0
        %445 = vmatmul.mubr.f32.gmra.mxu0 %v363
        %v446 = vpop.f32.mrf.mxu0
        %v447 = vadd.f32 %v348, %v446
        %v448 = vpop.f32.mrf.mxu0
        %v449 = vadd.f32 %v348, %v448
        %450 = vmatprep.mubr.f32.mxu0 0.0
        %451 = vmatmul.mubr.f32.gmra.mxu0 %v366
        %v452 = vpop.f32.mrf.mxu0
        %v453 = vadd.f32 %v353, %v452
        %v454 = vpop.f32.mrf.mxu0
        %v455 = vadd.f32 %v353, %v454
        %456 = vdwg.mxu0
        %457 = vmatprep.subr.mxu0 0.0
        %458 = vmatpush1.msra.mxu0 0.0
        %459 = vmatprep.subr.mxu0 0.0
        %460 = vmatpush1.msra.mxu0 0.0
        %461 = vmatprep.subr.mxu0 0.0
        %462 = vmatpush1.msra.mxu0 0.0
        %463 = vmatprep.subr.mxu0 0.0
        %464 = vmatpush1.msra.mxu0 0.0
        %465 = vmatprep.subr.mxu0 0.0
        %466 = vmatpush1.msra.mxu0 0.0
        %467 = vmatprep.subr.mxu0 0.0
        %468 = vmatpush1.msra.mxu0 0.0
        %469 = vmatprep.subr.mxu0 0.0
        %470 = vmatpush1.msra.mxu0 0.0
        %471 = vmatprep.subr.mxu0 0.0
        %472 = vmatpush1.msra.mxu0 0.0
        %473 = vmatprep.subr.mxu0 0.0
        %474 = vmatpush1.msra.mxu0 0.0
        %475 = vmatprep.subr.mxu0 0.0
        %476 = vmatpush1.msra.mxu0 0.0
        %477 = vmatprep.subr.mxu0 0.0
        %478 = vmatpush1.msra.mxu0 0.0
        %479 = vmatprep.subr.mxu0 0.0
        %480 = vmatpush1.msra.mxu0 0.0
        %481 = vmatprep.subr.mxu0 %v314
        %482 = vmatpush1.msra.mxu0 %v313
        %483 = vmatprep.subr.mxu0 %v298
        %484 = vmatpush1.msra.mxu0 %v297
        %485 = vmatprep.subr.mxu0 %v282
        %486 = vmatpush1.msra.mxu0 %v281
        %487 = vmatprep.subr.mxu0 %v266
        %488 = vmatpush1.msra.mxu0 %v265
        %489 = vmatprep.subr.mxu0 0.0
        %490 = vmatpush2.msra.mxu0 0.0
        %491 = vmatprep.subr.mxu0 0.0
        %492 = vmatpush2.msra.mxu0 0.0
        %493 = vmatprep.subr.mxu0 0.0
        %494 = vmatpush2.msra.mxu0 0.0
        %495 = vmatprep.subr.mxu0 0.0
        %496 = vmatpush2.msra.mxu0 0.0
        %497 = vmatprep.subr.mxu0 0.0
        %498 = vmatpush2.msra.mxu0 0.0
        %499 = vmatprep.subr.mxu0 0.0
        %500 = vmatpush2.msra.mxu0 0.0
        %501 = vmatprep.subr.mxu0 0.0
        %502 = vmatpush2.msra.mxu0 0.0
        %503 = vmatprep.subr.mxu0 0.0
        %504 = vmatpush2.msra.mxu0 0.0
        %505 = vmatprep.subr.mxu0 0.0
        %506 = vmatpush2.msra.mxu0 0.0
        %507 = vmatprep.subr.mxu0 0.0
        %508 = vmatpush2.msra.mxu0 0.0
        %509 = vmatprep.subr.mxu0 0.0
        %510 = vmatpush2.msra.mxu0 0.0
        %511 = vmatprep.subr.mxu0 0.0
        %512 = vmatpush2.msra.mxu0 0.0
        %513 = vmatprep.subr.mxu0 0.0
        %514 = vmatpush2.msra.mxu0 0.0
        %515 = vmatprep.subr.mxu0 0.0
        %516 = vmatpush2.msra.mxu0 0.0
        %517 = vmatprep.subr.mxu0 0.0
        %518 = vmatpush2.msra.mxu0 0.0
        %519 = vmatprep.subr.mxu0 0.0
        %520 = vmatpush2.msra.mxu0 0.0
        %521 = vmatprep.mubr.f32.mxu0 0.0
        %522 = vmatmul.mubr.f32.gmra.mxu0 %v357
        %v523 = vpop.f32.mrf.mxu0
        %v524 = vadd.f32 %v338, %v523
        %v525 = vpop.f32.mrf.mxu0
        %v526 = vadd.f32 %v338, %v525
        %527 = vmatprep.mubr.f32.mxu0 0.0
        %528 = vmatmul.mubr.f32.gmra.mxu0 %v360
        %v529 = vpop.f32.mrf.mxu0
        %v530 = vadd.f32 %v343, %v529
        %v531 = vpop.f32.mrf.mxu0
        %v532 = vadd.f32 %v343, %v531
        %533 = vmatprep.mubr.f32.mxu0 0.0
        %534 = vmatmul.mubr.f32.gmra.mxu0 %v363
        %v535 = vpop.f32.mrf.mxu0
        %v536 = vadd.f32 %v348, %v535
        %v537 = vpop.f32.mrf.mxu0
        %v538 = vadd.f32 %v348, %v537
        %539 = vmatprep.mubr.f32.mxu0 0.0
        %540 = vmatmul.mubr.f32.gmra.mxu0 %v366
        %v541 = vpop.f32.mrf.mxu0
        %v542 = vadd.f32 %v353, %v541
        %v543 = vpop.f32.mrf.mxu0
        %v544 = vadd.f32 %v353, %v543
        %545 = vdwg.mxu0
        %546 = vmatprep.subr.mxu0 0.0
        %547 = vmatpush1.msra.mxu0 0.0
        %548 = vmatprep.subr.mxu0 0.0
        %549 = vmatpush1.msra.mxu0 0.0
        %550 = vmatprep.subr.mxu0 0.0
        %551 = vmatpush1.msra.mxu0 0.0
        %552 = vmatprep.subr.mxu0 0.0
        %553 = vmatpush1.msra.mxu0 0.0
        %554 = vmatprep.subr.mxu0 0.0
        %555 = vmatpush1.msra.mxu0 0.0
        %556 = vmatprep.subr.mxu0 0.0
        %557 = vmatpush1.msra.mxu0 0.0
        %558 = vmatprep.subr.mxu0 0.0
        %559 = vmatpush1.msra.mxu0 0.0
        %560 = vmatprep.subr.mxu0 0.0
        %561 = vmatpush1.msra.mxu0 0.0
        %562 = vmatprep.subr.mxu0 0.0
        %563 = vmatpush1.msra.mxu0 0.0
        %564 = vmatprep.subr.mxu0 0.0
        %565 = vmatpush1.msra.mxu0 0.0
        %566 = vmatprep.subr.mxu0 0.0
        %567 = vmatpush1.msra.mxu0 0.0
        %568 = vmatprep.subr.mxu0 0.0
        %569 = vmatpush1.msra.mxu0 0.0
        %570 = vmatprep.subr.mxu0 %v316
        %571 = vmatpush1.msra.mxu0 %v315
        %572 = vmatprep.subr.mxu0 %v300
        %573 = vmatpush1.msra.mxu0 %v299
        %574 = vmatprep.subr.mxu0 %v284
        %575 = vmatpush1.msra.mxu0 %v283
        %576 = vmatprep.subr.mxu0 %v268
        %577 = vmatpush1.msra.mxu0 %v267
        %578 = vmatprep.subr.mxu0 0.0
        %579 = vmatpush2.msra.mxu0 0.0
        %580 = vmatprep.subr.mxu0 0.0
        %581 = vmatpush2.msra.mxu0 0.0
        %582 = vmatprep.subr.mxu0 0.0
        %583 = vmatpush2.msra.mxu0 0.0
        %584 = vmatprep.subr.mxu0 0.0
        %585 = vmatpush2.msra.mxu0 0.0
        %586 = vmatprep.subr.mxu0 0.0
        %587 = vmatpush2.msra.mxu0 0.0
        %588 = vmatprep.subr.mxu0 0.0
        %589 = vmatpush2.msra.mxu0 0.0
        %590 = vmatprep.subr.mxu0 0.0
        %591 = vmatpush2.msra.mxu0 0.0
        %592 = vmatprep.subr.mxu0 0.0
        %593 = vmatpush2.msra.mxu0 0.0
        %594 = vmatprep.subr.mxu0 0.0
        %595 = vmatpush2.msra.mxu0 0.0
        %596 = vmatprep.subr.mxu0 0.0
        %597 = vmatpush2.msra.mxu0 0.0
        %598 = vmatprep.subr.mxu0 0.0
        %599 = vmatpush2.msra.mxu0 0.0
        %600 = vmatprep.subr.mxu0 0.0
        %601 = vmatpush2.msra.mxu0 0.0
        %602 = vmatprep.subr.mxu0 0.0
        %603 = vmatpush2.msra.mxu0 0.0
        %604 = vmatprep.subr.mxu0 0.0
        %605 = vmatpush2.msra.mxu0 0.0
        %606 = vmatprep.subr.mxu0 0.0
        %607 = vmatpush2.msra.mxu0 0.0
        %608 = vmatprep.subr.mxu0 0.0
        %609 = vmatpush2.msra.mxu0 0.0
        %610 = vmatprep.mubr.f32.mxu0 0.0
        %611 = vmatmul.mubr.f32.gmra.mxu0 %v357
        %v612 = vpop.f32.mrf.mxu0
        %v613 = vadd.f32 %v338, %v612
        %v614 = vpop.f32.mrf.mxu0
        %v615 = vadd.f32 %v338, %v614
        %616 = vmatprep.mubr.f32.mxu0 0.0
        %617 = vmatmul.mubr.f32.gmra.mxu0 %v360
        %v618 = vpop.f32.mrf.mxu0
        %v619 = vadd.f32 %v343, %v618
        %v620 = vpop.f32.mrf.mxu0
        %v621 = vadd.f32 %v343, %v620
        %622 = vmatprep.mubr.f32.mxu0 0.0
        %623 = vmatmul.mubr.f32.gmra.mxu0 %v363
        %v624 = vpop.f32.mrf.mxu0
        %v625 = vadd.f32 %v348, %v624
        %v626 = vpop.f32.mrf.mxu0
        %v627 = vadd.f32 %v348, %v626
        %628 = vmatprep.mubr.f32.mxu0 0.0
        %629 = vmatmul.mubr.f32.gmra.mxu0 %v366
        %v630 = vpop.f32.mrf.mxu0
        %v631 = vadd.f32 %v353, %v630
        %v632 = vpop.f32.mrf.mxu0
        %v633 = vadd.f32 %v353, %v632
        %634 = vdwg.mxu0
        %635 = vmatprep.subr.mxu0 0.0
        %636 = vmatpush1.msra.mxu0 0.0
        %637 = vmatprep.subr.mxu0 0.0
        %638 = vmatpush1.msra.mxu0 0.0
        %639 = vmatprep.subr.mxu0 0.0
        %640 = vmatpush1.msra.mxu0 0.0
        %641 = vmatprep.subr.mxu0 0.0
        %642 = vmatpush1.msra.mxu0 0.0
        %643 = vmatprep.subr.mxu0 0.0
        %644 = vmatpush1.msra.mxu0 0.0
        %645 = vmatprep.subr.mxu0 0.0
        %646 = vmatpush1.msra.mxu0 0.0
        %647 = vmatprep.subr.mxu0 0.0
        %648 = vmatpush1.msra.mxu0 0.0
        %649 = vmatprep.subr.mxu0 0.0
        %650 = vmatpush1.msra.mxu0 0.0
        %651 = vmatprep.subr.mxu0 0.0
        %652 = vmatpush1.msra.mxu0 0.0
        %653 = vmatprep.subr.mxu0 0.0
        %654 = vmatpush1.msra.mxu0 0.0
        %655 = vmatprep.subr.mxu0 0.0
        %656 = vmatpush1.msra.mxu0 0.0
        %657 = vmatprep.subr.mxu0 0.0
        %658 = vmatpush1.msra.mxu0 0.0
        %659 = vmatprep.subr.mxu0 %v318
        %660 = vmatpush1.msra.mxu0 %v317
        %661 = vmatprep.subr.mxu0 %v302
        %662 = vmatpush1.msra.mxu0 %v301
        %663 = vmatprep.subr.mxu0 %v286
        %664 = vmatpush1.msra.mxu0 %v285
        %665 = vmatprep.subr.mxu0 %v270
        %666 = vmatpush1.msra.mxu0 %v269
        %667 = vmatprep.subr.mxu0 0.0
        %668 = vmatpush2.msra.mxu0 0.0
        %669 = vmatprep.subr.mxu0 0.0
        %670 = vmatpush2.msra.mxu0 0.0
        %671 = vmatprep.subr.mxu0 0.0
        %672 = vmatpush2.msra.mxu0 0.0
        %673 = vmatprep.subr.mxu0 0.0
        %674 = vmatpush2.msra.mxu0 0.0
        %675 = vmatprep.subr.mxu0 0.0
        %676 = vmatpush2.msra.mxu0 0.0
        %677 = vmatprep.subr.mxu0 0.0
        %678 = vmatpush2.msra.mxu0 0.0
        %679 = vmatprep.subr.mxu0 0.0
        %680 = vmatpush2.msra.mxu0 0.0
        %681 = vmatprep.subr.mxu0 0.0
        %682 = vmatpush2.msra.mxu0 0.0
        %683 = vmatprep.subr.mxu0 0.0
        %684 = vmatpush2.msra.mxu0 0.0
        %685 = vmatprep.subr.mxu0 0.0
        %686 = vmatpush2.msra.mxu0 0.0
        %687 = vmatprep.subr.mxu0 0.0
        %688 = vmatpush2.msra.mxu0 0.0
        %689 = vmatprep.subr.mxu0 0.0
        %690 = vmatpush2.msra.mxu0 0.0
        %691 = vmatprep.subr.mxu0 0.0
        %692 = vmatpush2.msra.mxu0 0.0
        %693 = vmatprep.subr.mxu0 0.0
        %694 = vmatpush2.msra.mxu0 0.0
        %695 = vmatprep.subr.mxu0 0.0
        %696 = vmatpush2.msra.mxu0 0.0
        %697 = vmatprep.subr.mxu0 0.0
        %698 = vmatpush2.msra.mxu0 0.0
        %699 = vmatprep.mubr.f32.mxu0 0.0
        %700 = vmatmul.mubr.f32.gmra.mxu0 %v357
        %v701 = vpop.f32.mrf.mxu0
        %v702 = vadd.f32 %v338, %v701
        %v703 = vpop.f32.mrf.mxu0
        %v704 = vadd.f32 %v338, %v703
        %705 = vmatprep.mubr.f32.mxu0 0.0
        %706 = vmatmul.mubr.f32.gmra.mxu0 %v360
        %v707 = vpop.f32.mrf.mxu0
        %v708 = vadd.f32 %v343, %v707
        %v709 = vpop.f32.mrf.mxu0
        %v710 = vadd.f32 %v343, %v709
        %711 = vmatprep.mubr.f32.mxu0 0.0
        %712 = vmatmul.mubr.f32.gmra.mxu0 %v363
        %v713 = vpop.f32.mrf.mxu0
        %v714 = vadd.f32 %v348, %v713
        %v715 = vpop.f32.mrf.mxu0
        %v716 = vadd.f32 %v348, %v715
        %717 = vmatprep.mubr.f32.mxu0 0.0
        %718 = vmatmul.mubr.f32.gmra.mxu0 %v366
        %v719 = vpop.f32.mrf.mxu0
        %v720 = vadd.f32 %v353, %v719
        %v721 = vpop.f32.mrf.mxu0
        %v722 = vadd.f32 %v353, %v721
        %723 = vdwg.mxu0
        %724 = vmatprep.subr.mxu0 0.0
        %725 = vmatpush1.msra.mxu0 0.0
        %726 = vmatprep.subr.mxu0 0.0
        %727 = vmatpush1.msra.mxu0 0.0
        %728 = vmatprep.subr.mxu0 0.0
        %729 = vmatpush1.msra.mxu0 0.0
        %730 = vmatprep.subr.mxu0 0.0
        %731 = vmatpush1.msra.mxu0 0.0
        %732 = vmatprep.subr.mxu0 0.0
        %733 = vmatpush1.msra.mxu0 0.0
        %734 = vmatprep.subr.mxu0 0.0
        %735 = vmatpush1.msra.mxu0 0.0
        %736 = vmatprep.subr.mxu0 0.0
        %737 = vmatpush1.msra.mxu0 0.0
        %738 = vmatprep.subr.mxu0 0.0
        %739 = vmatpush1.msra.mxu0 0.0
        %740 = vmatprep.subr.mxu0 0.0
        %741 = vmatpush1.msra.mxu0 0.0
        %742 = vmatprep.subr.mxu0 0.0
        %743 = vmatpush1.msra.mxu0 0.0
        %744 = vmatprep.subr.mxu0 0.0
        %745 = vmatpush1.msra.mxu0 0.0
        %746 = vmatprep.subr.mxu0 0.0
        %747 = vmatpush1.msra.mxu0 0.0
        %748 = vmatprep.subr.mxu0 %v320
        %749 = vmatpush1.msra.mxu0 %v319
        %750 = vmatprep.subr.mxu0 %v304
        %751 = vmatpush1.msra.mxu0 %v303
        %752 = vmatprep.subr.mxu0 %v288
        %753 = vmatpush1.msra.mxu0 %v287
        %754 = vmatprep.subr.mxu0 %v272
        %755 = vmatpush1.msra.mxu0 %v271
        %756 = vmatprep.subr.mxu0 0.0
        %757 = vmatpush2.msra.mxu0 0.0
        %758 = vmatprep.subr.mxu0 0.0
        %759 = vmatpush2.msra.mxu0 0.0
        %760 = vmatprep.subr.mxu0 0.0
        %761 = vmatpush2.msra.mxu0 0.0
        %762 = vmatprep.subr.mxu0 0.0
        %763 = vmatpush2.msra.mxu0 0.0
        %764 = vmatprep.subr.mxu0 0.0
        %765 = vmatpush2.msra.mxu0 0.0
        %766 = vmatprep.subr.mxu0 0.0
        %767 = vmatpush2.msra.mxu0 0.0
        %768 = vmatprep.subr.mxu0 0.0
        %769 = vmatpush2.msra.mxu0 0.0
        %770 = vmatprep.subr.mxu0 0.0
        %771 = vmatpush2.msra.mxu0 0.0
        %772 = vmatprep.subr.mxu0 0.0
        %773 = vmatpush2.msra.mxu0 0.0
        %774 = vmatprep.subr.mxu0 0.0
        %775 = vmatpush2.msra.mxu0 0.0
        %776 = vmatprep.subr.mxu0 0.0
        %777 = vmatpush2.msra.mxu0 0.0
        %778 = vmatprep.subr.mxu0 0.0
        %779 = vmatpush2.msra.mxu0 0.0
        %780 = vmatprep.subr.mxu0 0.0
        %781 = vmatpush2.msra.mxu0 0.0
        %782 = vmatprep.subr.mxu0 0.0
        %783 = vmatpush2.msra.mxu0 0.0
        %784 = vmatprep.subr.mxu0 0.0
        %785 = vmatpush2.msra.mxu0 0.0
        %786 = vmatprep.subr.mxu0 0.0
        %787 = vmatpush2.msra.mxu0 0.0
        %788 = vmatprep.mubr.f32.mxu0 0.0
        %789 = vmatmul.mubr.f32.gmra.mxu0 %v357
        %v790 = vpop.f32.mrf.mxu0
        %v791 = vadd.f32 %v338, %v790
        %v792 = vpop.f32.mrf.mxu0
        %v793 = vadd.f32 %v338, %v792
        %794 = vmatprep.mubr.f32.mxu0 0.0
        %795 = vmatmul.mubr.f32.gmra.mxu0 %v360
        %v796 = vpop.f32.mrf.mxu0
        %v797 = vadd.f32 %v343, %v796
        %v798 = vpop.f32.mrf.mxu0
        %v799 = vadd.f32 %v343, %v798
        %800 = vmatprep.mubr.f32.mxu0 0.0
        %801 = vmatmul.mubr.f32.gmra.mxu0 %v363
        %v802 = vpop.f32.mrf.mxu0
        %v803 = vadd.f32 %v348, %v802
        %v804 = vpop.f32.mrf.mxu0
        %v805 = vadd.f32 %v348, %v804
        %806 = vmatprep.mubr.f32.mxu0 0.0
        %807 = vmatmul.mubr.f32.gmra.mxu0 %v366
        %v808 = vpop.f32.mrf.mxu0
        %v809 = vadd.f32 %v353, %v808
        %v810 = vpop.f32.mrf.mxu0
        %v811 = vadd.f32 %v353, %v810
        %812 = vdwg.mxu0
        %813 = vmatprep.subr.mxu0 0.0
        %814 = vmatpush1.msra.mxu0 0.0
        %815 = vmatprep.subr.mxu0 0.0
        %816 = vmatpush1.msra.mxu0 0.0
        %817 = vmatprep.subr.mxu0 0.0
        %818 = vmatpush1.msra.mxu0 0.0
        %819 = vmatprep.subr.mxu0 0.0
        %820 = vmatpush1.msra.mxu0 0.0
        %821 = vmatprep.subr.mxu0 0.0
        %822 = vmatpush1.msra.mxu0 0.0
        %823 = vmatprep.subr.mxu0 0.0
        %824 = vmatpush1.msra.mxu0 0.0
        %825 = vmatprep.subr.mxu0 0.0
        %826 = vmatpush1.msra.mxu0 0.0
        %827 = vmatprep.subr.mxu0 0.0
        %828 = vmatpush1.msra.mxu0 0.0
        %829 = vmatprep.subr.mxu0 0.0
        %830 = vmatpush1.msra.mxu0 0.0
        %831 = vmatprep.subr.mxu0 0.0
        %832 = vmatpush1.msra.mxu0 0.0
        %833 = vmatprep.subr.mxu0 0.0
        %834 = vmatpush1.msra.mxu0 0.0
        %835 = vmatprep.subr.mxu0 0.0
        %836 = vmatpush1.msra.mxu0 0.0
        %837 = vmatprep.subr.mxu0 %v322
        %838 = vmatpush1.msra.mxu0 %v321
        %839 = vmatprep.subr.mxu0 %v306
        %840 = vmatpush1.msra.mxu0 %v305
        %841 = vmatprep.subr.mxu0 %v290
        %842 = vmatpush1.msra.mxu0 %v289
        %843 = vmatprep.subr.mxu0 %v274
        %844 = vmatpush1.msra.mxu0 %v273
        %845 = vmatprep.subr.mxu0 0.0
        %846 = vmatpush2.msra.mxu0 0.0
        %847 = vmatprep.subr.mxu0 0.0
        %848 = vmatpush2.msra.mxu0 0.0
        %849 = vmatprep.subr.mxu0 0.0
        %850 = vmatpush2.msra.mxu0 0.0
        %851 = vmatprep.subr.mxu0 0.0
        %852 = vmatpush2.msra.mxu0 0.0
        %853 = vmatprep.subr.mxu0 0.0
        %854 = vmatpush2.msra.mxu0 0.0
        %855 = vmatprep.subr.mxu0 0.0
        %856 = vmatpush2.msra.mxu0 0.0
        %857 = vmatprep.subr.mxu0 0.0
        %858 = vmatpush2.msra.mxu0 0.0
        %859 = vmatprep.subr.mxu0 0.0
        %860 = vmatpush2.msra.mxu0 0.0
        %861 = vmatprep.subr.mxu0 0.0
        %862 = vmatpush2.msra.mxu0 0.0
        %863 = vmatprep.subr.mxu0 0.0
        %864 = vmatpush2.msra.mxu0 0.0
        %865 = vmatprep.subr.mxu0 0.0
        %866 = vmatpush2.msra.mxu0 0.0
        %867 = vmatprep.subr.mxu0 0.0
        %868 = vmatpush2.msra.mxu0 0.0
        %869 = vmatprep.subr.mxu0 0.0
        %870 = vmatpush2.msra.mxu0 0.0
        %871 = vmatprep.subr.mxu0 0.0
        %872 = vmatpush2.msra.mxu0 0.0
        %873 = vmatprep.subr.mxu0 0.0
        %874 = vmatpush2.msra.mxu0 0.0
        %875 = vmatprep.subr.mxu0 0.0
        %876 = vmatpush2.msra.mxu0 0.0
        %877 = vmatprep.mubr.f32.mxu0 0.0
        %878 = vmatmul.mubr.f32.gmra.mxu0 %v357
        %v879 = vpop.f32.mrf.mxu0
        %v880 = vadd.f32 %v338, %v879
        %v881 = vpop.f32.mrf.mxu0
        %v882 = vadd.f32 %v338, %v881
        %883 = vmatprep.mubr.f32.mxu0 0.0
        %884 = vmatmul.mubr.f32.gmra.mxu0 %v360
        %v885 = vpop.f32.mrf.mxu0
        %v886 = vadd.f32 %v343, %v885
        %v887 = vpop.f32.mrf.mxu0
        %v888 = vadd.f32 %v343, %v887
        %889 = vmatprep.mubr.f32.mxu0 0.0
        %890 = vmatmul.mubr.f32.gmra.mxu0 %v363
        %v891 = vpop.f32.mrf.mxu0
        %v892 = vadd.f32 %v348, %v891
        %v893 = vpop.f32.mrf.mxu0
        %v894 = vadd.f32 %v348, %v893
        %895 = vmatprep.mubr.f32.mxu0 0.0
        %896 = vmatmul.mubr.f32.gmra.mxu0 %v366
        %v897 = vpop.f32.mrf.mxu0
        %v898 = vadd.f32 %v353, %v897
        %v899 = vpop.f32.mrf.mxu0
        %v900 = vadd.f32 %v353, %v899
        %901 = vdwg.mxu0
        %902 = vmatprep.subr.mxu0 0.0
        %903 = vmatpush1.msra.mxu0 0.0
        %904 = vmatprep.subr.mxu0 0.0
        %905 = vmatpush1.msra.mxu0 0.0
        %906 = vmatprep.subr.mxu0 0.0
        %907 = vmatpush1.msra.mxu0 0.0
        %908 = vmatprep.subr.mxu0 0.0
        %909 = vmatpush1.msra.mxu0 0.0
        %910 = vmatprep.subr.mxu0 0.0
        %911 = vmatpush1.msra.mxu0 0.0
        %912 = vmatprep.subr.mxu0 0.0
        %913 = vmatpush1.msra.mxu0 0.0
        %914 = vmatprep.subr.mxu0 0.0
        %915 = vmatpush1.msra.mxu0 0.0
        %916 = vmatprep.subr.mxu0 0.0
        %917 = vmatpush1.msra.mxu0 0.0
        %918 = vmatprep.subr.mxu0 0.0
        %919 = vmatpush1.msra.mxu0 0.0
        %920 = vmatprep.subr.mxu0 0.0
        %921 = vmatpush1.msra.mxu0 0.0
        %922 = vmatprep.subr.mxu0 0.0
        %923 = vmatpush1.msra.mxu0 0.0
        %924 = vmatprep.subr.mxu0 0.0
        %925 = vmatpush1.msra.mxu0 0.0
        %926 = vmatprep.subr.mxu0 %v324
        %927 = vmatpush1.msra.mxu0 %v323
        %928 = vmatprep.subr.mxu0 %v308
        %929 = vmatpush1.msra.mxu0 %v307
        %930 = vmatprep.subr.mxu0 %v292
        %931 = vmatpush1.msra.mxu0 %v291
        %932 = vmatprep.subr.mxu0 %v276
        %933 = vmatpush1.msra.mxu0 %v275
        %934 = vmatprep.subr.mxu0 0.0
        %935 = vmatpush2.msra.mxu0 0.0
        %936 = vmatprep.subr.mxu0 0.0
        %937 = vmatpush2.msra.mxu0 0.0
        %938 = vmatprep.subr.mxu0 0.0
        %939 = vmatpush2.msra.mxu0 0.0
        %940 = vmatprep.subr.mxu0 0.0
        %941 = vmatpush2.msra.mxu0 0.0
        %942 = vmatprep.subr.mxu0 0.0
        %943 = vmatpush2.msra.mxu0 0.0
        %944 = vmatprep.subr.mxu0 0.0
        %945 = vmatpush2.msra.mxu0 0.0
        %946 = vmatprep.subr.mxu0 0.0
        %947 = vmatpush2.msra.mxu0 0.0
        %948 = vmatprep.subr.mxu0 0.0
        %949 = vmatpush2.msra.mxu0 0.0
        %950 = vmatprep.subr.mxu0 0.0
        %951 = vmatpush2.msra.mxu0 0.0
        %952 = vmatprep.subr.mxu0 0.0
        %953 = vmatpush2.msra.mxu0 0.0
        %954 = vmatprep.subr.mxu0 0.0
        %955 = vmatpush2.msra.mxu0 0.0
        %956 = vmatprep.subr.mxu0 0.0
        %957 = vmatpush2.msra.mxu0 0.0
        %958 = vmatprep.subr.mxu0 0.0
        %959 = vmatpush2.msra.mxu0 0.0
        %960 = vmatprep.subr.mxu0 0.0
        %961 = vmatpush2.msra.mxu0 0.0
        %962 = vmatprep.subr.mxu0 0.0
        %963 = vmatpush2.msra.mxu0 0.0
        %964 = vmatprep.subr.mxu0 0.0
        %965 = vmatpush2.msra.mxu0 0.0
        %966 = vmatprep.mubr.f32.mxu0 0.0
        %967 = vmatmul.mubr.f32.gmra.mxu0 %v357
        %v968 = vpop.f32.mrf.mxu0
        %v969 = vadd.f32 %v338, %v968
        %v970 = vpop.f32.mrf.mxu0
        %v971 = vadd.f32 %v338, %v970
        %972 = vmatprep.mubr.f32.mxu0 0.0
        %973 = vmatmul.mubr.f32.gmra.mxu0 %v360
        %v974 = vpop.f32.mrf.mxu0
        %v975 = vadd.f32 %v343, %v974
        %v976 = vpop.f32.mrf.mxu0
        %v977 = vadd.f32 %v343, %v976
        %978 = vmatprep.mubr.f32.mxu0 0.0
        %979 = vmatmul.mubr.f32.gmra.mxu0 %v363
        %v980 = vpop.f32.mrf.mxu0
        %v981 = vadd.f32 %v348, %v980
        %v982 = vpop.f32.mrf.mxu0
        %v983 = vadd.f32 %v348, %v982
        %984 = vmatprep.mubr.f32.mxu0 0.0
        %985 = vmatmul.mubr.f32.gmra.mxu0 %v366
        %v986 = vpop.f32.mrf.mxu0
        %v987 = vadd.f32 %v353, %v986
        %v988 = vpop.f32.mrf.mxu0
        %v989 = vadd.f32 %v353, %v988
        %990 = vdwg.mxu0
        %991 = vmatprep.subr.mxu0 0.0
        %992 = vmatpush1.msra.mxu0 0.0
        %993 = vmatprep.subr.mxu0 0.0
        %994 = vmatpush1.msra.mxu0 0.0
        %995 = vmatprep.subr.mxu0 0.0
        %996 = vmatpush1.msra.mxu0 0.0
        %997 = vmatprep.subr.mxu0 0.0
        %998 = vmatpush1.msra.mxu0 0.0
        %999 = vmatprep.subr.mxu0 0.0
        %1000 = vmatpush1.msra.mxu0 0.0
        %1001 = vmatprep.subr.mxu0 0.0
        %1002 = vmatpush1.msra.mxu0 0.0
        %1003 = vmatprep.subr.mxu0 0.0
        %1004 = vmatpush1.msra.mxu0 0.0
        %1005 = vmatprep.subr.mxu0 0.0
        %1006 = vmatpush1.msra.mxu0 0.0
        %1007 = vmatprep.subr.mxu0 0.0
        %1008 = vmatpush1.msra.mxu0 0.0
        %1009 = vmatprep.subr.mxu0 0.0
        %1010 = vmatpush1.msra.mxu0 0.0
        %1011 = vmatprep.subr.mxu0 0.0
        %1012 = vmatpush1.msra.mxu0 0.0
        %1013 = vmatprep.subr.mxu0 0.0
        %1014 = vmatpush1.msra.mxu0 0.0
        %1015 = vmatprep.subr.mxu0 %v326
        %1016 = vmatpush1.msra.mxu0 %v325
        %1017 = vmatprep.subr.mxu0 %v310
        %1018 = vmatpush1.msra.mxu0 %v309
        %1019 = vmatprep.subr.mxu0 %v294
        %1020 = vmatpush1.msra.mxu0 %v293
        %1021 = vmatprep.subr.mxu0 %v278
        %1022 = vmatpush1.msra.mxu0 %v277
        %1023 = vmatprep.subr.mxu0 0.0
        %1024 = vmatpush2.msra.mxu0 0.0
        %1025 = vmatprep.subr.mxu0 0.0
        %1026 = vmatpush2.msra.mxu0 0.0
        %1027 = vmatprep.subr.mxu0 0.0
        %1028 = vmatpush2.msra.mxu0 0.0
        %1029 = vmatprep.subr.mxu0 0.0
        %1030 = vmatpush2.msra.mxu0 0.0
        %1031 = vmatprep.subr.mxu0 0.0
        %1032 = vmatpush2.msra.mxu0 0.0
        %1033 = vmatprep.subr.mxu0 0.0
        %1034 = vmatpush2.msra.mxu0 0.0
        %1035 = vmatprep.subr.mxu0 0.0
        %1036 = vmatpush2.msra.mxu0 0.0
        %1037 = vmatprep.subr.mxu0 0.0
        %1038 = vmatpush2.msra.mxu0 0.0
        %1039 = vmatprep.subr.mxu0 0.0
        %1040 = vmatpush2.msra.mxu0 0.0
        %1041 = vmatprep.subr.mxu0 0.0
        %1042 = vmatpush2.msra.mxu0 0.0
        %1043 = vmatprep.subr.mxu0 0.0
        %1044 = vmatpush2.msra.mxu0 0.0
        %1045 = vmatprep.subr.mxu0 0.0
        %1046 = vmatpush2.msra.mxu0 0.0
        %1047 = vmatprep.subr.mxu0 0.0
        %1048 = vmatpush2.msra.mxu0 0.0
        %1049 = vmatprep.subr.mxu0 0.0
        %1050 = vmatpush2.msra.mxu0 0.0
        %1051 = vmatprep.subr.mxu0 0.0
        %1052 = vmatpush2.msra.mxu0 0.0
        %1053 = vmatprep.subr.mxu0 0.0
        %1054 = vmatpush2.msra.mxu0 0.0
        %1055 = vmatprep.mubr.f32.mxu0 0.0
        %1056 = vmatmul.mubr.f32.gmra.mxu0 %v357
        %v1057 = vpop.f32.mrf.mxu0
        %v1058 = vadd.f32 %v338, %v1057
        %v1059 = vpop.f32.mrf.mxu0
        %v1060 = vadd.f32 %v338, %v1059
        %1061 = vmatprep.mubr.f32.mxu0 0.0
        %1062 = vmatmul.mubr.f32.gmra.mxu0 %v360
        %v1063 = vpop.f32.mrf.mxu0
        %v1064 = vadd.f32 %v343, %v1063
        %v1065 = vpop.f32.mrf.mxu0
        %v1066 = vadd.f32 %v343, %v1065
        %1067 = vmatprep.mubr.f32.mxu0 0.0
        %1068 = vmatmul.mubr.f32.gmra.mxu0 %v363
        %v1069 = vpop.f32.mrf.mxu0
        %v1070 = vadd.f32 %v348, %v1069
        %v1071 = vpop.f32.mrf.mxu0
        %v1072 = vadd.f32 %v348, %v1071
        %1073 = vmatprep.mubr.f32.mxu0 0.0
        %1074 = vmatmul.mubr.f32.gmra.mxu0 %v366
        %v1075 = vpop.f32.mrf.mxu0
        %v1076 = vadd.f32 %v353, %v1075
        %v1077 = vpop.f32.mrf.mxu0
        %v1078 = vadd.f32 %v353, %v1077
        %1079 = vdwg.mxu0
        %v1080 = vmax.f32 %v435, 0.0
        %v1081 = vmax.f32 %v437, 0.0
        %v1082 = vmax.f32 %v524, 0.0
        %v1083 = vmax.f32 %v526, 0.0
        %v1084 = vmax.f32 %v613, 0.0
        %v1085 = vmax.f32 %v615, 0.0
        %v1086 = vmax.f32 %v702, 0.0
        %v1087 = vmax.f32 %v704, 0.0
        %v1088 = vmax.f32 %v791, 0.0
        %v1089 = vmax.f32 %v793, 0.0
        %v1090 = vmax.f32 %v880, 0.0
        %v1091 = vmax.f32 %v882, 0.0
        %v1092 = vmax.f32 %v969, 0.0
        %v1093 = vmax.f32 %v971, 0.0
        %v1094 = vmax.f32 %v1058, 0.0
        %v1095 = vmax.f32 %v1060, 0.0
        %v1096 = vmax.f32 %v441, 0.0
        %v1097 = vmax.f32 %v443, 0.0
        %v1098 = vmax.f32 %v530, 0.0
        %v1099 = vmax.f32 %v532, 0.0
        %v1100 = vmax.f32 %v619, 0.0
        %v1101 = vmax.f32 %v621, 0.0
        %v1102 = vmax.f32 %v708, 0.0
        %v1103 = vmax.f32 %v710, 0.0
        %v1104 = vmax.f32 %v797, 0.0
        %v1105 = vmax.f32 %v799, 0.0
        %v1106 = vmax.f32 %v886, 0.0
        %v1107 = vmax.f32 %v888, 0.0
        %v1108 = vmax.f32 %v975, 0.0
        %v1109 = vmax.f32 %v977, 0.0
        %v1110 = vmax.f32 %v1064, 0.0
        %v1111 = vmax.f32 %v1066, 0.0
        %v1112 = vmax.f32 %v447, 0.0
        %v1113 = vmax.f32 %v449, 0.0
        %v1114 = vmax.f32 %v536, 0.0
        %v1115 = vmax.f32 %v538, 0.0
        %v1116 = vmax.f32 %v625, 0.0
        %v1117 = vmax.f32 %v627, 0.0
        %v1118 = vmax.f32 %v714, 0.0
        %v1119 = vmax.f32 %v716, 0.0
        %v1120 = vmax.f32 %v803, 0.0
        %v1121 = vmax.f32 %v805, 0.0
        %v1122 = vmax.f32 %v892, 0.0
        %v1123 = vmax.f32 %v894, 0.0
        %v1124 = vmax.f32 %v981, 0.0
        %v1125 = vmax.f32 %v983, 0.0
        %v1126 = vmax.f32 %v1070, 0.0
        %v1127 = vmax.f32 %v1072, 0.0
        %v1128 = vmax.f32 %v453, 0.0
        %v1129 = vmax.f32 %v455, 0.0
        %v1130 = vmax.f32 %v542, 0.0
        %v1131 = vmax.f32 %v544, 0.0
        %v1132 = vmax.f32 %v631, 0.0
        %v1133 = vmax.f32 %v633, 0.0
        %v1134 = vmax.f32 %v720, 0.0
        %v1135 = vmax.f32 %v722, 0.0
        %v1136 = vmax.f32 %v809, 0.0
        %v1137 = vmax.f32 %v811, 0.0
        %v1138 = vmax.f32 %v898, 0.0
        %v1139 = vmax.f32 %v900, 0.0
        %v1140 = vmax.f32 %v987, 0.0
        %v1141 = vmax.f32 %v989, 0.0
        %v1142 = vmax.f32 %v1076, 0.0
        %v1143 = vmax.f32 %v1078, 0.0
        %v1144 = vld [vmem:[%s3] sm:$0xff]
        %v1145 = vld [vmem:[%s3 + $0x8] sm:$0xff]
        %v1146 = vld [vmem:[%s3 + $0x10] sm:$0xff]
        %v1147 = vld [vmem:[%s3 + $0x18] sm:$0xff]
        %v1148 = vld [vmem:[%s4] sm:$0xff]
        %v1149 = vld [vmem:[%s4 + $0x8] sm:$0xff]
        %v1150 = vld [vmem:[%s4 + $0x10] sm:$0xff]
        %v1151 = vld [vmem:[%s4 + $0x18] sm:$0xff]
        %1153 = vset.pattern.permute.xlu0 0
        %1154 = vperm.xlu0 %1153, %v1148
        %v1155 = vpop.permute.xlu0 %1154
        %1158 = vset.pattern.permute.xlu0 0
        %1159 = vperm.xlu0 %1158, %v1149
        %v1160 = vpop.permute.xlu0 %1159
        %1163 = vset.pattern.permute.xlu0 0
        %1164 = vperm.xlu0 %1163, %v1150
        %v1165 = vpop.permute.xlu0 %1164
        %1168 = vset.pattern.permute.xlu0 0
        %1169 = vperm.xlu0 %1168, %v1151
        %v1170 = vpop.permute.xlu0 %1169
        %v1173 = vsel %vm355, %v1144, 0
        %v1176 = vsel %vm355, %v1145, 0
        %v1179 = vsel %vm355, %v1146, 0
        %v1182 = vsel %vm355, %v1147, 0
        %1184 = vmatprep.subr.mxu0 0.0
        %1185 = vmatpush1.msra.mxu0 0.0
        %1186 = vmatprep.subr.mxu0 0.0
        %1187 = vmatpush1.msra.mxu0 0.0
        %1188 = vmatprep.subr.mxu0 0.0
        %1189 = vmatpush1.msra.mxu0 0.0
        %1190 = vmatprep.subr.mxu0 0.0
        %1191 = vmatpush1.msra.mxu0 0.0
        %1192 = vmatprep.subr.mxu0 0.0
        %1193 = vmatpush1.msra.mxu0 0.0
        %1194 = vmatprep.subr.mxu0 0.0
        %1195 = vmatpush1.msra.mxu0 0.0
        %1196 = vmatprep.subr.mxu0 0.0
        %1197 = vmatpush1.msra.mxu0 0.0
        %1198 = vmatprep.subr.mxu0 0.0
        %1199 = vmatpush1.msra.mxu0 0.0
        %1200 = vmatprep.subr.mxu0 0.0
        %1201 = vmatpush1.msra.mxu0 0.0
        %1202 = vmatprep.subr.mxu0 0.0
        %1203 = vmatpush1.msra.mxu0 0.0
        %1204 = vmatprep.subr.mxu0 0.0
        %1205 = vmatpush1.msra.mxu0 0.0
        %1206 = vmatprep.subr.mxu0 0.0
        %1207 = vmatpush1.msra.mxu0 0.0
        %1208 = vmatprep.subr.mxu0 %v1129
        %1209 = vmatpush1.msra.mxu0 %v1128
        %1210 = vmatprep.subr.mxu0 %v1113
        %1211 = vmatpush1.msra.mxu0 %v1112
        %1212 = vmatprep.subr.mxu0 %v1097
        %1213 = vmatpush1.msra.mxu0 %v1096
        %1214 = vmatprep.subr.mxu0 %v1081
        %1215 = vmatpush1.msra.mxu0 %v1080
        %1216 = vmatprep.subr.mxu0 0.0
        %1217 = vmatpush2.msra.mxu0 0.0
        %1218 = vmatprep.subr.mxu0 0.0
        %1219 = vmatpush2.msra.mxu0 0.0
        %1220 = vmatprep.subr.mxu0 0.0
        %1221 = vmatpush2.msra.mxu0 0.0
        %1222 = vmatprep.subr.mxu0 0.0
        %1223 = vmatpush2.msra.mxu0 0.0
        %1224 = vmatprep.subr.mxu0 0.0
        %1225 = vmatpush2.msra.mxu0 0.0
        %1226 = vmatprep.subr.mxu0 0.0
        %1227 = vmatpush2.msra.mxu0 0.0
        %1228 = vmatprep.subr.mxu0 0.0
        %1229 = vmatpush2.msra.mxu0 0.0
        %1230 = vmatprep.subr.mxu0 0.0
        %1231 = vmatpush2.msra.mxu0 0.0
        %1232 = vmatprep.subr.mxu0 0.0
        %1233 = vmatpush2.msra.mxu0 0.0
        %1234 = vmatprep.subr.mxu0 0.0
        %1235 = vmatpush2.msra.mxu0 0.0
        %1236 = vmatprep.subr.mxu0 0.0
        %1237 = vmatpush2.msra.mxu0 0.0
        %1238 = vmatprep.subr.mxu0 0.0
        %1239 = vmatpush2.msra.mxu0 0.0
        %1240 = vmatprep.subr.mxu0 0.0
        %1241 = vmatpush2.msra.mxu0 0.0
        %1242 = vmatprep.subr.mxu0 0.0
        %1243 = vmatpush2.msra.mxu0 0.0
        %1244 = vmatprep.subr.mxu0 0.0
        %1245 = vmatpush2.msra.mxu0 0.0
        %1246 = vmatprep.subr.mxu0 0.0
        %1247 = vmatpush2.msra.mxu0 0.0
        %1248 = vmatprep.mubr.f32.mxu0 0.0
        %1249 = vmatmul.mubr.f32.gmra.mxu0 %v1173
        %v1250 = vpop.f32.mrf.mxu0
        %v1251 = vadd.f32 %v1155, %v1250
        %v1252 = vpop.f32.mrf.mxu0
        %v1253 = vadd.f32 %v1155, %v1252
        %1254 = vmatprep.mubr.f32.mxu0 0.0
        %1255 = vmatmul.mubr.f32.gmra.mxu0 %v1176
        %v1256 = vpop.f32.mrf.mxu0
        %v1257 = vadd.f32 %v1160, %v1256
        %v1258 = vpop.f32.mrf.mxu0
        %v1259 = vadd.f32 %v1160, %v1258
        %1260 = vmatprep.mubr.f32.mxu0 0.0
        %1261 = vmatmul.mubr.f32.gmra.mxu0 %v1179
        %v1262 = vpop.f32.mrf.mxu0
        %v1263 = vadd.f32 %v1165, %v1262
        %v1264 = vpop.f32.mrf.mxu0
        %v1265 = vadd.f32 %v1165, %v1264
        %1266 = vmatprep.mubr.f32.mxu0 0.0
        %1267 = vmatmul.mubr.f32.gmra.mxu0 %v1182
        %v1268 = vpop.f32.mrf.mxu0
        %v1269 = vadd.f32 %v1170, %v1268
        %v1270 = vpop.f32.mrf.mxu0
        %v1271 = vadd.f32 %v1170, %v1270
        %1272 = vdwg.mxu0
        %1273 = vmatprep.subr.mxu0 0.0
        %1274 = vmatpush1.msra.mxu0 0.0
        %1275 = vmatprep.subr.mxu0 0.0
        %1276 = vmatpush1.msra.mxu0 0.0
        %1277 = vmatprep.subr.mxu0 0.0
        %1278 = vmatpush1.msra.mxu0 0.0
        %1279 = vmatprep.subr.mxu0 0.0
        %1280 = vmatpush1.msra.mxu0 0.0
        %1281 = vmatprep.subr.mxu0 0.0
        %1282 = vmatpush1.msra.mxu0 0.0
        %1283 = vmatprep.subr.mxu0 0.0
        %1284 = vmatpush1.msra.mxu0 0.0
        %1285 = vmatprep.subr.mxu0 0.0
        %1286 = vmatpush1.msra.mxu0 0.0
        %1287 = vmatprep.subr.mxu0 0.0
        %1288 = vmatpush1.msra.mxu0 0.0
        %1289 = vmatprep.subr.mxu0 0.0
        %1290 = vmatpush1.msra.mxu0 0.0
        %1291 = vmatprep.subr.mxu0 0.0
        %1292 = vmatpush1.msra.mxu0 0.0
        %1293 = vmatprep.subr.mxu0 0.0
        %1294 = vmatpush1.msra.mxu0 0.0
        %1295 = vmatprep.subr.mxu0 0.0
        %1296 = vmatpush1.msra.mxu0 0.0
        %1297 = vmatprep.subr.mxu0 %v1131
        %1298 = vmatpush1.msra.mxu0 %v1130
        %1299 = vmatprep.subr.mxu0 %v1115
        %1300 = vmatpush1.msra.mxu0 %v1114
        %1301 = vmatprep.subr.mxu0 %v1099
        %1302 = vmatpush1.msra.mxu0 %v1098
        %1303 = vmatprep.subr.mxu0 %v1083
        %1304 = vmatpush1.msra.mxu0 %v1082
        %1305 = vmatprep.subr.mxu0 0.0
        %1306 = vmatpush2.msra.mxu0 0.0
        %1307 = vmatprep.subr.mxu0 0.0
        %1308 = vmatpush2.msra.mxu0 0.0
        %1309 = vmatprep.subr.mxu0 0.0
        %1310 = vmatpush2.msra.mxu0 0.0
        %1311 = vmatprep.subr.mxu0 0.0
        %1312 = vmatpush2.msra.mxu0 0.0
        %1313 = vmatprep.subr.mxu0 0.0
        %1314 = vmatpush2.msra.mxu0 0.0
        %1315 = vmatprep.subr.mxu0 0.0
        %1316 = vmatpush2.msra.mxu0 0.0
        %1317 = vmatprep.subr.mxu0 0.0
        %1318 = vmatpush2.msra.mxu0 0.0
        %1319 = vmatprep.subr.mxu0 0.0
        %1320 = vmatpush2.msra.mxu0 0.0
        %1321 = vmatprep.subr.mxu0 0.0
        %1322 = vmatpush2.msra.mxu0 0.0
        %1323 = vmatprep.subr.mxu0 0.0
        %1324 = vmatpush2.msra.mxu0 0.0
        %1325 = vmatprep.subr.mxu0 0.0
        %1326 = vmatpush2.msra.mxu0 0.0
        %1327 = vmatprep.subr.mxu0 0.0
        %1328 = vmatpush2.msra.mxu0 0.0
        %1329 = vmatprep.subr.mxu0 0.0
        %1330 = vmatpush2.msra.mxu0 0.0
        %1331 = vmatprep.subr.mxu0 0.0
        %1332 = vmatpush2.msra.mxu0 0.0
        %1333 = vmatprep.subr.mxu0 0.0
        %1334 = vmatpush2.msra.mxu0 0.0
        %1335 = vmatprep.subr.mxu0 0.0
        %1336 = vmatpush2.msra.mxu0 0.0
        %1337 = vmatprep.mubr.f32.mxu0 0.0
        %1338 = vmatmul.mubr.f32.gmra.mxu0 %v1173
        %v1339 = vpop.f32.mrf.mxu0
        %v1340 = vadd.f32 %v1155, %v1339
        %v1341 = vpop.f32.mrf.mxu0
        %v1342 = vadd.f32 %v1155, %v1341
        %1343 = vmatprep.mubr.f32.mxu0 0.0
        %1344 = vmatmul.mubr.f32.gmra.mxu0 %v1176
        %v1345 = vpop.f32.mrf.mxu0
        %v1346 = vadd.f32 %v1160, %v1345
        %v1347 = vpop.f32.mrf.mxu0
        %v1348 = vadd.f32 %v1160, %v1347
        %1349 = vmatprep.mubr.f32.mxu0 0.0
        %1350 = vmatmul.mubr.f32.gmra.mxu0 %v1179
        %v1351 = vpop.f32.mrf.mxu0
        %v1352 = vadd.f32 %v1165, %v1351
        %v1353 = vpop.f32.mrf.mxu0
        %v1354 = vadd.f32 %v1165, %v1353
        %1355 = vmatprep.mubr.f32.mxu0 0.0
        %1356 = vmatmul.mubr.f32.gmra.mxu0 %v1182
        %v1357 = vpop.f32.mrf.mxu0
        %v1358 = vadd.f32 %v1170, %v1357
        %v1359 = vpop.f32.mrf.mxu0
        %v1360 = vadd.f32 %v1170, %v1359
        %1361 = vdwg.mxu0
        %1362 = vmatprep.subr.mxu0 0.0
        %1363 = vmatpush1.msra.mxu0 0.0
        %1364 = vmatprep.subr.mxu0 0.0
        %1365 = vmatpush1.msra.mxu0 0.0
        %1366 = vmatprep.subr.mxu0 0.0
        %1367 = vmatpush1.msra.mxu0 0.0
        %1368 = vmatprep.subr.mxu0 0.0
        %1369 = vmatpush1.msra.mxu0 0.0
        %1370 = vmatprep.subr.mxu0 0.0
        %1371 = vmatpush1.msra.mxu0 0.0
        %1372 = vmatprep.subr.mxu0 0.0
        %1373 = vmatpush1.msra.mxu0 0.0
        %1374 = vmatprep.subr.mxu0 0.0
        %1375 = vmatpush1.msra.mxu0 0.0
        %1376 = vmatprep.subr.mxu0 0.0
        %1377 = vmatpush1.msra.mxu0 0.0
        %1378 = vmatprep.subr.mxu0 0.0
        %1379 = vmatpush1.msra.mxu0 0.0
        %1380 = vmatprep.subr.mxu0 0.0
        %1381 = vmatpush1.msra.mxu0 0.0
        %1382 = vmatprep.subr.mxu0 0.0
        %1383 = vmatpush1.msra.mxu0 0.0
        %1384 = vmatprep.subr.mxu0 0.0
        %1385 = vmatpush1.msra.mxu0 0.0
        %1386 = vmatprep.subr.mxu0 %v1133
        %1387 = vmatpush1.msra.mxu0 %v1132
        %1388 = vmatprep.subr.mxu0 %v1117
        %1389 = vmatpush1.msra.mxu0 %v1116
        %1390 = vmatprep.subr.mxu0 %v1101
        %1391 = vmatpush1.msra.mxu0 %v1100
        %1392 = vmatprep.subr.mxu0 %v1085
        %1393 = vmatpush1.msra.mxu0 %v1084
        %1394 = vmatprep.subr.mxu0 0.0
        %1395 = vmatpush2.msra.mxu0 0.0
        %1396 = vmatprep.subr.mxu0 0.0
        %1397 = vmatpush2.msra.mxu0 0.0
        %1398 = vmatprep.subr.mxu0 0.0
        %1399 = vmatpush2.msra.mxu0 0.0
        %1400 = vmatprep.subr.mxu0 0.0
        %1401 = vmatpush2.msra.mxu0 0.0
        %1402 = vmatprep.subr.mxu0 0.0
        %1403 = vmatpush2.msra.mxu0 0.0
        %1404 = vmatprep.subr.mxu0 0.0
        %1405 = vmatpush2.msra.mxu0 0.0
        %1406 = vmatprep.subr.mxu0 0.0
        %1407 = vmatpush2.msra.mxu0 0.0
        %1408 = vmatprep.subr.mxu0 0.0
        %1409 = vmatpush2.msra.mxu0 0.0
        %1410 = vmatprep.subr.mxu0 0.0
        %1411 = vmatpush2.msra.mxu0 0.0
        %1412 = vmatprep.subr.mxu0 0.0
        %1413 = vmatpush2.msra.mxu0 0.0
        %1414 = vmatprep.subr.mxu0 0.0
        %1415 = vmatpush2.msra.mxu0 0.0
        %1416 = vmatprep.subr.mxu0 0.0
        %1417 = vmatpush2.msra.mxu0 0.0
        %1418 = vmatprep.subr.mxu0 0.0
        %1419 = vmatpush2.msra.mxu0 0.0
        %1420 = vmatprep.subr.mxu0 0.0
        %1421 = vmatpush2.msra.mxu0 0.0
        %1422 = vmatprep.subr.mxu0 0.0
        %1423 = vmatpush2.msra.mxu0 0.0
        %1424 = vmatprep.subr.mxu0 0.0
        %1425 = vmatpush2.msra.mxu0 0.0
        %1426 = vmatprep.mubr.f32.mxu0 0.0
        %1427 = vmatmul.mubr.f32.gmra.mxu0 %v1173
        %v1428 = vpop.f32.mrf.mxu0
        %v1429 = vadd.f32 %v1155, %v1428
        %v1430 = vpop.f32.mrf.mxu0
        %v1431 = vadd.f32 %v1155, %v1430
        %1432 = vmatprep.mubr.f32.mxu0 0.0
        %1433 = vmatmul.mubr.f32.gmra.mxu0 %v1176
        %v1434 = vpop.f32.mrf.mxu0
        %v1435 = vadd.f32 %v1160, %v1434
        %v1436 = vpop.f32.mrf.mxu0
        %v1437 = vadd.f32 %v1160, %v1436
        %1438 = vmatprep.mubr.f32.mxu0 0.0
        %1439 = vmatmul.mubr.f32.gmra.mxu0 %v1179
        %v1440 = vpop.f32.mrf.mxu0
        %v1441 = vadd.f32 %v1165, %v1440
        %v1442 = vpop.f32.mrf.mxu0
        %v1443 = vadd.f32 %v1165, %v1442
        %1444 = vmatprep.mubr.f32.mxu0 0.0
        %1445 = vmatmul.mubr.f32.gmra.mxu0 %v1182
        %v1446 = vpop.f32.mrf.mxu0
        %v1447 = vadd.f32 %v1170, %v1446
        %v1448 = vpop.f32.mrf.mxu0
        %v1449 = vadd.f32 %v1170, %v1448
        %1450 = vdwg.mxu0
        %1451 = vmatprep.subr.mxu0 0.0
        %1452 = vmatpush1.msra.mxu0 0.0
        %1453 = vmatprep.subr.mxu0 0.0
        %1454 = vmatpush1.msra.mxu0 0.0
        %1455 = vmatprep.subr.mxu0 0.0
        %1456 = vmatpush1.msra.mxu0 0.0
        %1457 = vmatprep.subr.mxu0 0.0
        %1458 = vmatpush1.msra.mxu0 0.0
        %1459 = vmatprep.subr.mxu0 0.0
        %1460 = vmatpush1.msra.mxu0 0.0
        %1461 = vmatprep.subr.mxu0 0.0
        %1462 = vmatpush1.msra.mxu0 0.0
        %1463 = vmatprep.subr.mxu0 0.0
        %1464 = vmatpush1.msra.mxu0 0.0
        %1465 = vmatprep.subr.mxu0 0.0
        %1466 = vmatpush1.msra.mxu0 0.0
        %1467 = vmatprep.subr.mxu0 0.0
        %1468 = vmatpush1.msra.mxu0 0.0
        %1469 = vmatprep.subr.mxu0 0.0
        %1470 = vmatpush1.msra.mxu0 0.0
        %1471 = vmatprep.subr.mxu0 0.0
        %1472 = vmatpush1.msra.mxu0 0.0
        %1473 = vmatprep.subr.mxu0 0.0
        %1474 = vmatpush1.msra.mxu0 0.0
        %1475 = vmatprep.subr.mxu0 %v1135
        %1476 = vmatpush1.msra.mxu0 %v1134
        %1477 = vmatprep.subr.mxu0 %v1119
        %1478 = vmatpush1.msra.mxu0 %v1118
        %1479 = vmatprep.subr.mxu0 %v1103
        %1480 = vmatpush1.msra.mxu0 %v1102
        %1481 = vmatprep.subr.mxu0 %v1087
        %1482 = vmatpush1.msra.mxu0 %v1086
        %1483 = vmatprep.subr.mxu0 0.0
        %1484 = vmatpush2.msra.mxu0 0.0
        %1485 = vmatprep.subr.mxu0 0.0
        %1486 = vmatpush2.msra.mxu0 0.0
        %1487 = vmatprep.subr.mxu0 0.0
        %1488 = vmatpush2.msra.mxu0 0.0
        %1489 = vmatprep.subr.mxu0 0.0
        %1490 = vmatpush2.msra.mxu0 0.0
        %1491 = vmatprep.subr.mxu0 0.0
        %1492 = vmatpush2.msra.mxu0 0.0
        %1493 = vmatprep.subr.mxu0 0.0
        %1494 = vmatpush2.msra.mxu0 0.0
        %1495 = vmatprep.subr.mxu0 0.0
        %1496 = vmatpush2.msra.mxu0 0.0
        %1497 = vmatprep.subr.mxu0 0.0
        %1498 = vmatpush2.msra.mxu0 0.0
        %1499 = vmatprep.subr.mxu0 0.0
        %1500 = vmatpush2.msra.mxu0 0.0
        %1501 = vmatprep.subr.mxu0 0.0
        %1502 = vmatpush2.msra.mxu0 0.0
        %1503 = vmatprep.subr.mxu0 0.0
        %1504 = vmatpush2.msra.mxu0 0.0
        %1505 = vmatprep.subr.mxu0 0.0
        %1506 = vmatpush2.msra.mxu0 0.0
        %1507 = vmatprep.subr.mxu0 0.0
        %1508 = vmatpush2.msra.mxu0 0.0
        %1509 = vmatprep.subr.mxu0 0.0
        %1510 = vmatpush2.msra.mxu0 0.0
        %1511 = vmatprep.subr.mxu0 0.0
        %1512 = vmatpush2.msra.mxu0 0.0
        %1513 = vmatprep.subr.mxu0 0.0
        %1514 = vmatpush2.msra.mxu0 0.0
        %1515 = vmatprep.mubr.f32.mxu0 0.0
        %1516 = vmatmul.mubr.f32.gmra.mxu0 %v1173
        %v1517 = vpop.f32.mrf.mxu0
        %v1518 = vadd.f32 %v1155, %v1517
        %v1519 = vpop.f32.mrf.mxu0
        %v1520 = vadd.f32 %v1155, %v1519
        %1521 = vmatprep.mubr.f32.mxu0 0.0
        %1522 = vmatmul.mubr.f32.gmra.mxu0 %v1176
        %v1523 = vpop.f32.mrf.mxu0
        %v1524 = vadd.f32 %v1160, %v1523
        %v1525 = vpop.f32.mrf.mxu0
        %v1526 = vadd.f32 %v1160, %v1525
        %1527 = vmatprep.mubr.f32.mxu0 0.0
        %1528 = vmatmul.mubr.f32.gmra.mxu0 %v1179
        %v1529 = vpop.f32.mrf.mxu0
        %v1530 = vadd.f32 %v1165, %v1529
        %v1531 = vpop.f32.mrf.mxu0
        %v1532 = vadd.f32 %v1165, %v1531
        %1533 = vmatprep.mubr.f32.mxu0 0.0
        %1534 = vmatmul.mubr.f32.gmra.mxu0 %v1182
        %v1535 = vpop.f32.mrf.mxu0
        %v1536 = vadd.f32 %v1170, %v1535
        %v1537 = vpop.f32.mrf.mxu0
        %v1538 = vadd.f32 %v1170, %v1537
        %1539 = vdwg.mxu0
        %1540 = vmatprep.subr.mxu0 0.0
        %1541 = vmatpush1.msra.mxu0 0.0
        %1542 = vmatprep.subr.mxu0 0.0
        %1543 = vmatpush1.msra.mxu0 0.0
        %1544 = vmatprep.subr.mxu0 0.0
        %1545 = vmatpush1.msra.mxu0 0.0
        %1546 = vmatprep.subr.mxu0 0.0
        %1547 = vmatpush1.msra.mxu0 0.0
        %1548 = vmatprep.subr.mxu0 0.0
        %1549 = vmatpush1.msra.mxu0 0.0
        %1550 = vmatprep.subr.mxu0 0.0
        %1551 = vmatpush1.msra.mxu0 0.0
        %1552 = vmatprep.subr.mxu0 0.0
        %1553 = vmatpush1.msra.mxu0 0.0
        %1554 = vmatprep.subr.mxu0 0.0
        %1555 = vmatpush1.msra.mxu0 0.0
        %1556 = vmatprep.subr.mxu0 0.0
        %1557 = vmatpush1.msra.mxu0 0.0
        %1558 = vmatprep.subr.mxu0 0.0
        %1559 = vmatpush1.msra.mxu0 0.0
        %1560 = vmatprep.subr.mxu0 0.0
        %1561 = vmatpush1.msra.mxu0 0.0
        %1562 = vmatprep.subr.mxu0 0.0
        %1563 = vmatpush1.msra.mxu0 0.0
        %1564 = vmatprep.subr.mxu0 %v1137
        %1565 = vmatpush1.msra.mxu0 %v1136
        %1566 = vmatprep.subr.mxu0 %v1121
        %1567 = vmatpush1.msra.mxu0 %v1120
        %1568 = vmatprep.subr.mxu0 %v1105
        %1569 = vmatpush1.msra.mxu0 %v1104
        %1570 = vmatprep.subr.mxu0 %v1089
        %1571 = vmatpush1.msra.mxu0 %v1088
        %1572 = vmatprep.subr.mxu0 0.0
        %1573 = vmatpush2.msra.mxu0 0.0
        %1574 = vmatprep.subr.mxu0 0.0
        %1575 = vmatpush2.msra.mxu0 0.0
        %1576 = vmatprep.subr.mxu0 0.0
        %1577 = vmatpush2.msra.mxu0 0.0
        %1578 = vmatprep.subr.mxu0 0.0
        %1579 = vmatpush2.msra.mxu0 0.0
        %1580 = vmatprep.subr.mxu0 0.0
        %1581 = vmatpush2.msra.mxu0 0.0
        %1582 = vmatprep.subr.mxu0 0.0
        %1583 = vmatpush2.msra.mxu0 0.0
        %1584 = vmatprep.subr.mxu0 0.0
        %1585 = vmatpush2.msra.mxu0 0.0
        %1586 = vmatprep.subr.mxu0 0.0
        %1587 = vmatpush2.msra.mxu0 0.0
        %1588 = vmatprep.subr.mxu0 0.0
        %1589 = vmatpush2.msra.mxu0 0.0
        %1590 = vmatprep.subr.mxu0 0.0
        %1591 = vmatpush2.msra.mxu0 0.0
        %1592 = vmatprep.subr.mxu0 0.0
        %1593 = vmatpush2.msra.mxu0 0.0
        %1594 = vmatprep.subr.mxu0 0.0
        %1595 = vmatpush2.msra.mxu0 0.0
        %1596 = vmatprep.subr.mxu0 0.0
        %1597 = vmatpush2.msra.mxu0 0.0
        %1598 = vmatprep.subr.mxu0 0.0
        %1599 = vmatpush2.msra.mxu0 0.0
        %1600 = vmatprep.subr.mxu0 0.0
        %1601 = vmatpush2.msra.mxu0 0.0
        %1602 = vmatprep.subr.mxu0 0.0
        %1603 = vmatpush2.msra.mxu0 0.0
        %1604 = vmatprep.mubr.f32.mxu0 0.0
        %1605 = vmatmul.mubr.f32.gmra.mxu0 %v1173
        %v1606 = vpop.f32.mrf.mxu0
        %v1607 = vadd.f32 %v1155, %v1606
        %v1608 = vpop.f32.mrf.mxu0
        %v1609 = vadd.f32 %v1155, %v1608
        %1610 = vmatprep.mubr.f32.mxu0 0.0
        %1611 = vmatmul.mubr.f32.gmra.mxu0 %v1176
        %v1612 = vpop.f32.mrf.mxu0
        %v1613 = vadd.f32 %v1160, %v1612
        %v1614 = vpop.f32.mrf.mxu0
        %v1615 = vadd.f32 %v1160, %v1614
        %1616 = vmatprep.mubr.f32.mxu0 0.0
        %1617 = vmatmul.mubr.f32.gmra.mxu0 %v1179
        %v1618 = vpop.f32.mrf.mxu0
        %v1619 = vadd.f32 %v1165, %v1618
        %v1620 = vpop.f32.mrf.mxu0
        %v1621 = vadd.f32 %v1165, %v1620
        %1622 = vmatprep.mubr.f32.mxu0 0.0
        %1623 = vmatmul.mubr.f32.gmra.mxu0 %v1182
        %v1624 = vpop.f32.mrf.mxu0
        %v1625 = vadd.f32 %v1170, %v1624
        %v1626 = vpop.f32.mrf.mxu0
        %v1627 = vadd.f32 %v1170, %v1626
        %1628 = vdwg.mxu0
        %1629 = vmatprep.subr.mxu0 0.0
        %1630 = vmatpush1.msra.mxu0 0.0
        %1631 = vmatprep.subr.mxu0 0.0
        %1632 = vmatpush1.msra.mxu0 0.0
        %1633 = vmatprep.subr.mxu0 0.0
        %1634 = vmatpush1.msra.mxu0 0.0
        %1635 = vmatprep.subr.mxu0 0.0
        %1636 = vmatpush1.msra.mxu0 0.0
        %1637 = vmatprep.subr.mxu0 0.0
        %1638 = vmatpush1.msra.mxu0 0.0
        %1639 = vmatprep.subr.mxu0 0.0
        %1640 = vmatpush1.msra.mxu0 0.0
        %1641 = vmatprep.subr.mxu0 0.0
        %1642 = vmatpush1.msra.mxu0 0.0
        %1643 = vmatprep.subr.mxu0 0.0
        %1644 = vmatpush1.msra.mxu0 0.0
        %1645 = vmatprep.subr.mxu0 0.0
        %1646 = vmatpush1.msra.mxu0 0.0
        %1647 = vmatprep.subr.mxu0 0.0
        %1648 = vmatpush1.msra.mxu0 0.0
        %1649 = vmatprep.subr.mxu0 0.0
        %1650 = vmatpush1.msra.mxu0 0.0
        %1651 = vmatprep.subr.mxu0 0.0
        %1652 = vmatpush1.msra.mxu0 0.0
        %1653 = vmatprep.subr.mxu0 %v1139
        %1654 = vmatpush1.msra.mxu0 %v1138
        %1655 = vmatprep.subr.mxu0 %v1123
        %1656 = vmatpush1.msra.mxu0 %v1122
        %1657 = vmatprep.subr.mxu0 %v1107
        %1658 = vmatpush1.msra.mxu0 %v1106
        %1659 = vmatprep.subr.mxu0 %v1091
        %1660 = vmatpush1.msra.mxu0 %v1090
        %1661 = vmatprep.subr.mxu0 0.0
        %1662 = vmatpush2.msra.mxu0 0.0
        %1663 = vmatprep.subr.mxu0 0.0
        %1664 = vmatpush2.msra.mxu0 0.0
        %1665 = vmatprep.subr.mxu0 0.0
        %1666 = vmatpush2.msra.mxu0 0.0
        %1667 = vmatprep.subr.mxu0 0.0
        %1668 = vmatpush2.msra.mxu0 0.0
        %1669 = vmatprep.subr.mxu0 0.0
        %1670 = vmatpush2.msra.mxu0 0.0
        %1671 = vmatprep.subr.mxu0 0.0
        %1672 = vmatpush2.msra.mxu0 0.0
        %1673 = vmatprep.subr.mxu0 0.0
        %1674 = vmatpush2.msra.mxu0 0.0
        %1675 = vmatprep.subr.mxu0 0.0
        %1676 = vmatpush2.msra.mxu0 0.0
        %1677 = vmatprep.subr.mxu0 0.0
        %1678 = vmatpush2.msra.mxu0 0.0
        %1679 = vmatprep.subr.mxu0 0.0
        %1680 = vmatpush2.msra.mxu0 0.0
        %1681 = vmatprep.subr.mxu0 0.0
        %1682 = vmatpush2.msra.mxu0 0.0
        %1683 = vmatprep.subr.mxu0 0.0
        %1684 = vmatpush2.msra.mxu0 0.0
        %1685 = vmatprep.subr.mxu0 0.0
        %1686 = vmatpush2.msra.mxu0 0.0
        %1687 = vmatprep.subr.mxu0 0.0
        %1688 = vmatpush2.msra.mxu0 0.0
        %1689 = vmatprep.subr.mxu0 0.0
        %1690 = vmatpush2.msra.mxu0 0.0
        %1691 = vmatprep.subr.mxu0 0.0
        %1692 = vmatpush2.msra.mxu0 0.0
        %1693 = vmatprep.mubr.f32.mxu0 0.0
        %1694 = vmatmul.mubr.f32.gmra.mxu0 %v1173
        %v1695 = vpop.f32.mrf.mxu0
        %v1696 = vadd.f32 %v1155, %v1695
        %v1697 = vpop.f32.mrf.mxu0
        %v1698 = vadd.f32 %v1155, %v1697
        %1699 = vmatprep.mubr.f32.mxu0 0.0
        %1700 = vmatmul.mubr.f32.gmra.mxu0 %v1176
        %v1701 = vpop.f32.mrf.mxu0
        %v1702 = vadd.f32 %v1160, %v1701
        %v1703 = vpop.f32.mrf.mxu0
        %v1704 = vadd.f32 %v1160, %v1703
        %1705 = vmatprep.mubr.f32.mxu0 0.0
        %1706 = vmatmul.mubr.f32.gmra.mxu0 %v1179
        %v1707 = vpop.f32.mrf.mxu0
        %v1708 = vadd.f32 %v1165, %v1707
        %v1709 = vpop.f32.mrf.mxu0
        %v1710 = vadd.f32 %v1165, %v1709
        %1711 = vmatprep.mubr.f32.mxu0 0.0
        %1712 = vmatmul.mubr.f32.gmra.mxu0 %v1182
        %v1713 = vpop.f32.mrf.mxu0
        %v1714 = vadd.f32 %v1170, %v1713
        %v1715 = vpop.f32.mrf.mxu0
        %v1716 = vadd.f32 %v1170, %v1715
        %1717 = vdwg.mxu0
        %1718 = vmatprep.subr.mxu0 0.0
        %1719 = vmatpush1.msra.mxu0 0.0
        %1720 = vmatprep.subr.mxu0 0.0
        %1721 = vmatpush1.msra.mxu0 0.0
        %1722 = vmatprep.subr.mxu0 0.0
        %1723 = vmatpush1.msra.mxu0 0.0
        %1724 = vmatprep.subr.mxu0 0.0
        %1725 = vmatpush1.msra.mxu0 0.0
        %1726 = vmatprep.subr.mxu0 0.0
        %1727 = vmatpush1.msra.mxu0 0.0
        %1728 = vmatprep.subr.mxu0 0.0
        %1729 = vmatpush1.msra.mxu0 0.0
        %1730 = vmatprep.subr.mxu0 0.0
        %1731 = vmatpush1.msra.mxu0 0.0
        %1732 = vmatprep.subr.mxu0 0.0
        %1733 = vmatpush1.msra.mxu0 0.0
        %1734 = vmatprep.subr.mxu0 0.0
        %1735 = vmatpush1.msra.mxu0 0.0
        %1736 = vmatprep.subr.mxu0 0.0
        %1737 = vmatpush1.msra.mxu0 0.0
        %1738 = vmatprep.subr.mxu0 0.0
        %1739 = vmatpush1.msra.mxu0 0.0
        %1740 = vmatprep.subr.mxu0 0.0
        %1741 = vmatpush1.msra.mxu0 0.0
        %1742 = vmatprep.subr.mxu0 %v1141
        %1743 = vmatpush1.msra.mxu0 %v1140
        %1744 = vmatprep.subr.mxu0 %v1125
        %1745 = vmatpush1.msra.mxu0 %v1124
        %1746 = vmatprep.subr.mxu0 %v1109
        %1747 = vmatpush1.msra.mxu0 %v1108
        %1748 = vmatprep.subr.mxu0 %v1093
        %1749 = vmatpush1.msra.mxu0 %v1092
        %1750 = vmatprep.subr.mxu0 0.0
        %1751 = vmatpush2.msra.mxu0 0.0
        %1752 = vmatprep.subr.mxu0 0.0
        %1753 = vmatpush2.msra.mxu0 0.0
        %1754 = vmatprep.subr.mxu0 0.0
        %1755 = vmatpush2.msra.mxu0 0.0
        %1756 = vmatprep.subr.mxu0 0.0
        %1757 = vmatpush2.msra.mxu0 0.0
        %1758 = vmatprep.subr.mxu0 0.0
        %1759 = vmatpush2.msra.mxu0 0.0
        %1760 = vmatprep.subr.mxu0 0.0
        %1761 = vmatpush2.msra.mxu0 0.0
        %1762 = vmatprep.subr.mxu0 0.0
        %1763 = vmatpush2.msra.mxu0 0.0
        %1764 = vmatprep.subr.mxu0 0.0
        %1765 = vmatpush2.msra.mxu0 0.0
        %1766 = vmatprep.subr.mxu0 0.0
        %1767 = vmatpush2.msra.mxu0 0.0
        %1768 = vmatprep.subr.mxu0 0.0
        %1769 = vmatpush2.msra.mxu0 0.0
        %1770 = vmatprep.subr.mxu0 0.0
        %1771 = vmatpush2.msra.mxu0 0.0
        %1772 = vmatprep.subr.mxu0 0.0
        %1773 = vmatpush2.msra.mxu0 0.0
        %1774 = vmatprep.subr.mxu0 0.0
        %1775 = vmatpush2.msra.mxu0 0.0
        %1776 = vmatprep.subr.mxu0 0.0
        %1777 = vmatpush2.msra.mxu0 0.0
        %1778 = vmatprep.subr.mxu0 0.0
        %1779 = vmatpush2.msra.mxu0 0.0
        %1780 = vmatprep.subr.mxu0 0.0
        %1781 = vmatpush2.msra.mxu0 0.0
        %1782 = vmatprep.mubr.f32.mxu0 0.0
        %1783 = vmatmul.mubr.f32.gmra.mxu0 %v1173
        %v1784 = vpop.f32.mrf.mxu0
        %v1785 = vadd.f32 %v1155, %v1784
        %v1786 = vpop.f32.mrf.mxu0
        %v1787 = vadd.f32 %v1155, %v1786
        %1788 = vmatprep.mubr.f32.mxu0 0.0
        %1789 = vmatmul.mubr.f32.gmra.mxu0 %v1176
        %v1790 = vpop.f32.mrf.mxu0
        %v1791 = vadd.f32 %v1160, %v1790
        %v1792 = vpop.f32.mrf.mxu0
        %v1793 = vadd.f32 %v1160, %v1792
        %1794 = vmatprep.mubr.f32.mxu0 0.0
        %1795 = vmatmul.mubr.f32.gmra.mxu0 %v1179
        %v1796 = vpop.f32.mrf.mxu0
        %v1797 = vadd.f32 %v1165, %v1796
        %v1798 = vpop.f32.mrf.mxu0
        %v1799 = vadd.f32 %v1165, %v1798
        %1800 = vmatprep.mubr.f32.mxu0 0.0
        %1801 = vmatmul.mubr.f32.gmra.mxu0 %v1182
        %v1802 = vpop.f32.mrf.mxu0
        %v1803 = vadd.f32 %v1170, %v1802
        %v1804 = vpop.f32.mrf.mxu0
        %v1805 = vadd.f32 %v1170, %v1804
        %1806 = vdwg.mxu0
        %1807 = vmatprep.subr.mxu0 0.0
        %1808 = vmatpush1.msra.mxu0 0.0
        %1809 = vmatprep.subr.mxu0 0.0
        %1810 = vmatpush1.msra.mxu0 0.0
        %1811 = vmatprep.subr.mxu0 0.0
        %1812 = vmatpush1.msra.mxu0 0.0
        %1813 = vmatprep.subr.mxu0 0.0
        %1814 = vmatpush1.msra.mxu0 0.0
        %1815 = vmatprep.subr.mxu0 0.0
        %1816 = vmatpush1.msra.mxu0 0.0
        %1817 = vmatprep.subr.mxu0 0.0
        %1818 = vmatpush1.msra.mxu0 0.0
        %1819 = vmatprep.subr.mxu0 0.0
        %1820 = vmatpush1.msra.mxu0 0.0
        %1821 = vmatprep.subr.mxu0 0.0
        %1822 = vmatpush1.msra.mxu0 0.0
        %1823 = vmatprep.subr.mxu0 0.0
        %1824 = vmatpush1.msra.mxu0 0.0
        %1825 = vmatprep.subr.mxu0 0.0
        %1826 = vmatpush1.msra.mxu0 0.0
        %1827 = vmatprep.subr.mxu0 0.0
        %1828 = vmatpush1.msra.mxu0 0.0
        %1829 = vmatprep.subr.mxu0 0.0
        %1830 = vmatpush1.msra.mxu0 0.0
        %1831 = vmatprep.subr.mxu0 %v1143
        %1832 = vmatpush1.msra.mxu0 %v1142
        %1833 = vmatprep.subr.mxu0 %v1127
        %1834 = vmatpush1.msra.mxu0 %v1126
        %1835 = vmatprep.subr.mxu0 %v1111
        %1836 = vmatpush1.msra.mxu0 %v1110
        %1837 = vmatprep.subr.mxu0 %v1095
        %1838 = vmatpush1.msra.mxu0 %v1094
        %1839 = vmatprep.subr.mxu0 0.0
        %1840 = vmatpush2.msra.mxu0 0.0
        %1841 = vmatprep.subr.mxu0 0.0
        %1842 = vmatpush2.msra.mxu0 0.0
        %1843 = vmatprep.subr.mxu0 0.0
        %1844 = vmatpush2.msra.mxu0 0.0
        %1845 = vmatprep.subr.mxu0 0.0
        %1846 = vmatpush2.msra.mxu0 0.0
        %1847 = vmatprep.subr.mxu0 0.0
        %1848 = vmatpush2.msra.mxu0 0.0
        %1849 = vmatprep.subr.mxu0 0.0
        %1850 = vmatpush2.msra.mxu0 0.0
        %1851 = vmatprep.subr.mxu0 0.0
        %1852 = vmatpush2.msra.mxu0 0.0
        %1853 = vmatprep.subr.mxu0 0.0
        %1854 = vmatpush2.msra.mxu0 0.0
        %1855 = vmatprep.subr.mxu0 0.0
        %1856 = vmatpush2.msra.mxu0 0.0
        %1857 = vmatprep.subr.mxu0 0.0
        %1858 = vmatpush2.msra.mxu0 0.0
        %1859 = vmatprep.subr.mxu0 0.0
        %1860 = vmatpush2.msra.mxu0 0.0
        %1861 = vmatprep.subr.mxu0 0.0
        %1862 = vmatpush2.msra.mxu0 0.0
        %1863 = vmatprep.subr.mxu0 0.0
        %1864 = vmatpush2.msra.mxu0 0.0
        %1865 = vmatprep.subr.mxu0 0.0
        %1866 = vmatpush2.msra.mxu0 0.0
        %1867 = vmatprep.subr.mxu0 0.0
        %1868 = vmatpush2.msra.mxu0 0.0
        %1869 = vmatprep.subr.mxu0 0.0
        %1870 = vmatpush2.msra.mxu0 0.0
        %1871 = vmatprep.mubr.f32.mxu0 0.0
        %1872 = vmatmul.mubr.f32.gmra.mxu0 %v1173
        %v1873 = vpop.f32.mrf.mxu0
        %v1874 = vadd.f32 %v1155, %v1873
        %v1875 = vpop.f32.mrf.mxu0
        %v1876 = vadd.f32 %v1155, %v1875
        %1877 = vmatprep.mubr.f32.mxu0 0.0
        %1878 = vmatmul.mubr.f32.gmra.mxu0 %v1176
        %v1879 = vpop.f32.mrf.mxu0
        %v1880 = vadd.f32 %v1160, %v1879
        %v1881 = vpop.f32.mrf.mxu0
        %v1882 = vadd.f32 %v1160, %v1881
        %1883 = vmatprep.mubr.f32.mxu0 0.0
        %1884 = vmatmul.mubr.f32.gmra.mxu0 %v1179
        %v1885 = vpop.f32.mrf.mxu0
        %v1886 = vadd.f32 %v1165, %v1885
        %v1887 = vpop.f32.mrf.mxu0
        %v1888 = vadd.f32 %v1165, %v1887
        %1889 = vmatprep.mubr.f32.mxu0 0.0
        %1890 = vmatmul.mubr.f32.gmra.mxu0 %v1182
        %v1891 = vpop.f32.mrf.mxu0
        %v1892 = vadd.f32 %v1170, %v1891
        %v1893 = vpop.f32.mrf.mxu0
        %v1894 = vadd.f32 %v1170, %v1893
        %1895 = vdwg.mxu0
        %v1896 = vlaneseq
        %v1897 = vshrl.u32 %v1896, 7
        %vm1898 = vcmp.lt.s32.totalorder %v1897, 3
        %v1899 = vsel %vm1898, %v1269, -inf
        %v1900 = vsel %vm1898, %v1271, -inf
        %v1901 = vsel %vm1898, %v1358, -inf
        %v1902 = vsel %vm1898, %v1360, -inf
        %v1903 = vsel %vm1898, %v1447, -inf
        %v1904 = vsel %vm1898, %v1449, -inf
        %v1905 = vsel %vm1898, %v1536, -inf
        %v1906 = vsel %vm1898, %v1538, -inf
        %v1907 = vsel %vm1898, %v1625, -inf
        %v1908 = vsel %vm1898, %v1627, -inf
        %v1909 = vsel %vm1898, %v1714, -inf
        %v1910 = vsel %vm1898, %v1716, -inf
        %v1911 = vsel %vm1898, %v1803, -inf
        %v1912 = vsel %vm1898, %v1805, -inf
        %v1913 = vsel %vm1898, %v1892, -inf
        %v1914 = vsel %vm1898, %v1894, -inf
        %v1915 = vrot.slane %v1899, 4
        %v1916 = vmax.f32 %v1899, %v1915
        %v1917 = vrot.slane %v1916, 2
        %v1918 = vmax.f32 %v1916, %v1917
        %v1919 = vrot.slane %v1918, 1
        %v1920 = vmax.f32 %v1918, %v1919
        %v1921 = vrot.slane %v1900, 4
        %v1922 = vmax.f32 %v1900, %v1921
        %v1923 = vrot.slane %v1922, 2
        %v1924 = vmax.f32 %v1922, %v1923
        %v1925 = vrot.slane %v1924, 1
        %v1926 = vmax.f32 %v1924, %v1925
        %v1927 = vrot.slane %v1901, 4
        %v1928 = vmax.f32 %v1901, %v1927
        %v1929 = vrot.slane %v1928, 2
        %v1930 = vmax.f32 %v1928, %v1929
        %v1931 = vrot.slane %v1930, 1
        %v1932 = vmax.f32 %v1930, %v1931
        %v1933 = vrot.slane %v1902, 4
        %v1934 = vmax.f32 %v1902, %v1933
        %v1935 = vrot.slane %v1934, 2
        %v1936 = vmax.f32 %v1934, %v1935
        %v1937 = vrot.slane %v1936, 1
        %v1938 = vmax.f32 %v1936, %v1937
        %v1939 = vrot.slane %v1903, 4
        %v1940 = vmax.f32 %v1903, %v1939
        %v1941 = vrot.slane %v1940, 2
        %v1942 = vmax.f32 %v1940, %v1941
        %v1943 = vrot.slane %v1942, 1
        %v1944 = vmax.f32 %v1942, %v1943
        %v1945 = vrot.slane %v1904, 4
        %v1946 = vmax.f32 %v1904, %v1945
        %v1947 = vrot.slane %v1946, 2
        %v1948 = vmax.f32 %v1946, %v1947
        %v1949 = vrot.slane %v1948, 1
        %v1950 = vmax.f32 %v1948, %v1949
        %v1951 = vrot.slane %v1905, 4
        %v1952 = vmax.f32 %v1905, %v1951
        %v1953 = vrot.slane %v1952, 2
        %v1954 = vmax.f32 %v1952, %v1953
        %v1955 = vrot.slane %v1954, 1
        %v1956 = vmax.f32 %v1954, %v1955
        %v1957 = vrot.slane %v1906, 4
        %v1958 = vmax.f32 %v1906, %v1957
        %v1959 = vrot.slane %v1958, 2
        %v1960 = vmax.f32 %v1958, %v1959
        %v1961 = vrot.slane %v1960, 1
        %v1962 = vmax.f32 %v1960, %v1961
        %v1963 = vrot.slane %v1907, 4
        %v1964 = vmax.f32 %v1907, %v1963
        %v1965 = vrot.slane %v1964, 2
        %v1966 = vmax.f32 %v1964, %v1965
        %v1967 = vrot.slane %v1966, 1
        %v1968 = vmax.f32 %v1966, %v1967
        %v1969 = vrot.slane %v1908, 4
        %v1970 = vmax.f32 %v1908, %v1969
        %v1971 = vrot.slane %v1970, 2
        %v1972 = vmax.f32 %v1970, %v1971
        %v1973 = vrot.slane %v1972, 1
        %v1974 = vmax.f32 %v1972, %v1973
        %v1975 = vrot.slane %v1909, 4
        %v1976 = vmax.f32 %v1909, %v1975
        %v1977 = vrot.slane %v1976, 2
        %v1978 = vmax.f32 %v1976, %v1977
        %v1979 = vrot.slane %v1978, 1
        %v1980 = vmax.f32 %v1978, %v1979
        %v1981 = vrot.slane %v1910, 4
        %v1982 = vmax.f32 %v1910, %v1981
        %v1983 = vrot.slane %v1982, 2
        %v1984 = vmax.f32 %v1982, %v1983
        %v1985 = vrot.slane %v1984, 1
        %v1986 = vmax.f32 %v1984, %v1985
        %v1987 = vrot.slane %v1911, 4
        %v1988 = vmax.f32 %v1911, %v1987
        %v1989 = vrot.slane %v1988, 2
        %v1990 = vmax.f32 %v1988, %v1989
        %v1991 = vrot.slane %v1990, 1
        %v1992 = vmax.f32 %v1990, %v1991
        %v1993 = vrot.slane %v1912, 4
        %v1994 = vmax.f32 %v1912, %v1993
        %v1995 = vrot.slane %v1994, 2
        %v1996 = vmax.f32 %v1994, %v1995
        %v1997 = vrot.slane %v1996, 1
        %v1998 = vmax.f32 %v1996, %v1997
        %v1999 = vrot.slane %v1913, 4
        %v2000 = vmax.f32 %v1913, %v1999
        %v2001 = vrot.slane %v2000, 2
        %v2002 = vmax.f32 %v2000, %v2001
        %v2003 = vrot.slane %v2002, 1
        %v2004 = vmax.f32 %v2002, %v2003
        %v2005 = vrot.slane %v1914, 4
        %v2006 = vmax.f32 %v1914, %v2005
        %v2007 = vrot.slane %v2006, 2
        %v2008 = vmax.f32 %v2006, %v2007
        %v2009 = vrot.slane %v2008, 1
        %v2010 = vmax.f32 %v2008, %v2009
        %v2011 = vsub.f32 %v1269, %v1920
        %v2012 = vsub.f32 %v1271, %v1926
        %v2013 = vsub.f32 %v1358, %v1932
        %v2014 = vsub.f32 %v1360, %v1938
        %v2015 = vsub.f32 %v1447, %v1944
        %v2016 = vsub.f32 %v1449, %v1950
        %v2017 = vsub.f32 %v1536, %v1956
        %v2018 = vsub.f32 %v1538, %v1962
        %v2019 = vsub.f32 %v1625, %v1968
        %v2020 = vsub.f32 %v1627, %v1974
        %v2021 = vsub.f32 %v1714, %v1980
        %v2022 = vsub.f32 %v1716, %v1986
        %v2023 = vsub.f32 %v1803, %v1992
        %v2024 = vsub.f32 %v1805, %v1998
        %v2025 = vsub.f32 %v1892, %v2004
        %v2026 = vsub.f32 %v1894, %v2010
        %v2027 = vmul.f32 %v2011, 1.442695
        %v2028 = vpow.pop %v2027
        %v2029 = vmul.f32 %v2012, 1.442695
        %v2030 = vpow.pop %v2029
        %v2031 = vmul.f32 %v2013, 1.442695
        %v2032 = vpow.pop %v2031
        %v2033 = vmul.f32 %v2014, 1.442695
        %v2034 = vpow.pop %v2033
        %v2035 = vmul.f32 %v2015, 1.442695
        %v2036 = vpow.pop %v2035
        %v2037 = vmul.f32 %v2016, 1.442695
        %v2038 = vpow.pop %v2037
        %v2039 = vmul.f32 %v2017, 1.442695
        %v2040 = vpow.pop %v2039
        %v2041 = vmul.f32 %v2018, 1.442695
        %v2042 = vpow.pop %v2041
        %v2043 = vmul.f32 %v2019, 1.442695
        %v2044 = vpow.pop %v2043
        %v2045 = vmul.f32 %v2020, 1.442695
        %v2046 = vpow.pop %v2045
        %v2047 = vmul.f32 %v2021, 1.442695
        %v2048 = vpow.pop %v2047
        %v2049 = vmul.f32 %v2022, 1.442695
        %v2050 = vpow.pop %v2049
        %v2051 = vmul.f32 %v2023, 1.442695
        %v2052 = vpow.pop %v2051
        %v2053 = vmul.f32 %v2024, 1.442695
        %v2054 = vpow.pop %v2053
        %v2055 = vmul.f32 %v2025, 1.442695
        %v2056 = vpow.pop %v2055
        %v2057 = vmul.f32 %v2026, 1.442695
        %v2058 = vpow.pop %v2057
        %v2059 = vsel %vm1898, %v2028, 0.0
        %v2060 = vsel %vm1898, %v2030, 0.0
        %v2061 = vsel %vm1898, %v2032, 0.0
        %v2062 = vsel %vm1898, %v2034, 0.0
        %v2063 = vsel %vm1898, %v2036, 0.0
        %v2064 = vsel %vm1898, %v2038, 0.0
        %v2065 = vsel %vm1898, %v2040, 0.0
        %v2066 = vsel %vm1898, %v2042, 0.0
        %v2067 = vsel %vm1898, %v2044, 0.0
        %v2068 = vsel %vm1898, %v2046, 0.0
        %v2069 = vsel %vm1898, %v2048, 0.0
        %v2070 = vsel %vm1898, %v2050, 0.0
        %v2071 = vsel %vm1898, %v2052, 0.0
        %v2072 = vsel %vm1898, %v2054, 0.0
        %v2073 = vsel %vm1898, %v2056, 0.0
        %v2074 = vsel %vm1898, %v2058, 0.0
        %v2075 = vrot.slane %v2059, 4
        %v2076 = vadd.f32 %v2059, %v2075
        %v2077 = vrot.slane %v2076, 2
        %v2078 = vadd.f32 %v2076, %v2077
        %v2079 = vrot.slane %v2078, 1
        %v2080 = vadd.f32 %v2078, %v2079
        %v2081 = vrot.slane %v2060, 4
        %v2082 = vadd.f32 %v2060, %v2081
        %v2083 = vrot.slane %v2082, 2
        %v2084 = vadd.f32 %v2082, %v2083
        %v2085 = vrot.slane %v2084, 1
        %v2086 = vadd.f32 %v2084, %v2085
        %v2087 = vrot.slane %v2061, 4
        %v2088 = vadd.f32 %v2061, %v2087
        %v2089 = vrot.slane %v2088, 2
        %v2090 = vadd.f32 %v2088, %v2089
        %v2091 = vrot.slane %v2090, 1
        %v2092 = vadd.f32 %v2090, %v2091
        %v2093 = vrot.slane %v2062, 4
        %v2094 = vadd.f32 %v2062, %v2093
        %v2095 = vrot.slane %v2094, 2
        %v2096 = vadd.f32 %v2094, %v2095
        %v2097 = vrot.slane %v2096, 1
        %v2098 = vadd.f32 %v2096, %v2097
        %v2099 = vrot.slane %v2063, 4
        %v2100 = vadd.f32 %v2063, %v2099
        %v2101 = vrot.slane %v2100, 2
        %v2102 = vadd.f32 %v2100, %v2101
        %v2103 = vrot.slane %v2102, 1
        %v2104 = vadd.f32 %v2102, %v2103
        %v2105 = vrot.slane %v2064, 4
        %v2106 = vadd.f32 %v2064, %v2105
        %v2107 = vrot.slane %v2106, 2
        %v2108 = vadd.f32 %v2106, %v2107
        %v2109 = vrot.slane %v2108, 1
        %v2110 = vadd.f32 %v2108, %v2109
        %v2111 = vrot.slane %v2065, 4
        %v2112 = vadd.f32 %v2065, %v2111
        %v2113 = vrot.slane %v2112, 2
        %v2114 = vadd.f32 %v2112, %v2113
        %v2115 = vrot.slane %v2114, 1
        %v2116 = vadd.f32 %v2114, %v2115
        %v2117 = vrot.slane %v2066, 4
        %v2118 = vadd.f32 %v2066, %v2117
        %v2119 = vrot.slane %v2118, 2
        %v2120 = vadd.f32 %v2118, %v2119
        %v2121 = vrot.slane %v2120, 1
        %v2122 = vadd.f32 %v2120, %v2121
        %v2123 = vrot.slane %v2067, 4
        %v2124 = vadd.f32 %v2067, %v2123
        %v2125 = vrot.slane %v2124, 2
        %v2126 = vadd.f32 %v2124, %v2125
        %v2127 = vrot.slane %v2126, 1
        %v2128 = vadd.f32 %v2126, %v2127
        %v2129 = vrot.slane %v2068, 4
        %v2130 = vadd.f32 %v2068, %v2129
        %v2131 = vrot.slane %v2130, 2
        %v2132 = vadd.f32 %v2130, %v2131
        %v2133 = vrot.slane %v2132, 1
        %v2134 = vadd.f32 %v2132, %v2133
        %v2135 = vrot.slane %v2069, 4
        %v2136 = vadd.f32 %v2069, %v2135
        %v2137 = vrot.slane %v2136, 2
        %v2138 = vadd.f32 %v2136, %v2137
        %v2139 = vrot.slane %v2138, 1
        %v2140 = vadd.f32 %v2138, %v2139
        %v2141 = vrot.slane %v2070, 4
        %v2142 = vadd.f32 %v2070, %v2141
        %v2143 = vrot.slane %v2142, 2
        %v2144 = vadd.f32 %v2142, %v2143
        %v2145 = vrot.slane %v2144, 1
        %v2146 = vadd.f32 %v2144, %v2145
        %v2147 = vrot.slane %v2071, 4
        %v2148 = vadd.f32 %v2071, %v2147
        %v2149 = vrot.slane %v2148, 2
        %v2150 = vadd.f32 %v2148, %v2149
        %v2151 = vrot.slane %v2150, 1
        %v2152 = vadd.f32 %v2150, %v2151
        %v2153 = vrot.slane %v2072, 4
        %v2154 = vadd.f32 %v2072, %v2153
        %v2155 = vrot.slane %v2154, 2
        %v2156 = vadd.f32 %v2154, %v2155
        %v2157 = vrot.slane %v2156, 1
        %v2158 = vadd.f32 %v2156, %v2157
        %v2159 = vrot.slane %v2073, 4
        %v2160 = vadd.f32 %v2073, %v2159
        %v2161 = vrot.slane %v2160, 2
        %v2162 = vadd.f32 %v2160, %v2161
        %v2163 = vrot.slane %v2162, 1
        %v2164 = vadd.f32 %v2162, %v2163
        %v2165 = vrot.slane %v2074, 4
        %v2166 = vadd.f32 %v2074, %v2165
        %v2167 = vrot.slane %v2166, 2
        %v2168 = vadd.f32 %v2166, %v2167
        %v2169 = vrot.slane %v2168, 1
        %v2170 = vadd.f32 %v2168, %v2169
        %v2171 = vrcp.pop %v2080
        %v2172 = vrcp.pop %v2086
        %v2173 = vrcp.pop %v2092
        %v2174 = vrcp.pop %v2098
        %v2175 = vrcp.pop %v2104
        %v2176 = vrcp.pop %v2110
        %v2177 = vrcp.pop %v2116
        %v2178 = vrcp.pop %v2122
        %v2179 = vrcp.pop %v2128
        %v2180 = vrcp.pop %v2134
        %v2181 = vrcp.pop %v2140
        %v2182 = vrcp.pop %v2146
        %v2183 = vrcp.pop %v2152
        %v2184 = vrcp.pop %v2158
        %v2185 = vrcp.pop %v2164
        %v2186 = vrcp.pop %v2170
        %v2187 = vmul.f32 %v2059, %v2171
        %v2188 = vmul.f32 %v2060, %v2172
        %v2189 = vmul.f32 %v2061, %v2173
        %v2190 = vmul.f32 %v2062, %v2174
        %v2191 = vmul.f32 %v2063, %v2175
        %v2192 = vmul.f32 %v2064, %v2176
        %v2193 = vmul.f32 %v2065, %v2177
        %v2194 = vmul.f32 %v2066, %v2178
        %v2195 = vmul.f32 %v2067, %v2179
        %v2196 = vmul.f32 %v2068, %v2180
        %v2197 = vmul.f32 %v2069, %v2181
        %v2198 = vmul.f32 %v2070, %v2182
        %v2199 = vmul.f32 %v2071, %v2183
        %v2200 = vmul.f32 %v2072, %v2184
        %v2201 = vmul.f32 %v2073, %v2185
        %v2202 = vmul.f32 %v2074, %v2186
        %2203 = vst [vmem:[%s260] sm:$0xff] %v1251
        %2204 = vst [vmem:[%s260 + $0x8] sm:$0xff] %v1253
        %2205 = vst [vmem:[%s260 + $0x10] sm:$0xff] %v1340
        %2206 = vst [vmem:[%s260 + $0x18] sm:$0xff] %v1342
        %2207 = vst [vmem:[%s260 + $0x20] sm:$0xff] %v1429
        %2208 = vst [vmem:[%s260 + $0x28] sm:$0xff] %v1431
        %2209 = vst [vmem:[%s260 + $0x30] sm:$0xff] %v1518
        %2210 = vst [vmem:[%s260 + $0x38] sm:$0xff] %v1520
        %2211 = vst [vmem:[%s260 + $0x40] sm:$0xff] %v1607
        %2212 = vst [vmem:[%s260 + $0x48] sm:$0xff] %v1609
        %2213 = vst [vmem:[%s260 + $0x50] sm:$0xff] %v1696
        %2214 = vst [vmem:[%s260 + $0x58] sm:$0xff] %v1698
        %2215 = vst [vmem:[%s260 + $0x60] sm:$0xff] %v1785
        %2216 = vst [vmem:[%s260 + $0x68] sm:$0xff] %v1787
        %2217 = vst [vmem:[%s260 + $0x70] sm:$0xff] %v1874
        %2218 = vst [vmem:[%s260 + $0x78] sm:$0xff] %v1876
        %2219 = vst [vmem:[%s260 + $0x80] sm:$0xff] %v1257
        %2220 = vst [vmem:[%s260 + $0x88] sm:$0xff] %v1259
        %2221 = vst [vmem:[%s260 + $0x90] sm:$0xff] %v1346
        %2222 = vst [vmem:[%s260 + $0x98] sm:$0xff] %v1348
        %2223 = vst [vmem:[%s260 + $0xa0] sm:$0xff] %v1435
        %2224 = vst [vmem:[%s260 + $0xa8] sm:$0xff] %v1437
        %2225 = vst [vmem:[%s260 + $0xb0] sm:$0xff] %v1524
        %2226 = vst [vmem:[%s260 + $0xb8] sm:$0xff] %v1526
        %2227 = vst [vmem:[%s260 + $0xc0] sm:$0xff] %v1613
        %2228 = vst [vmem:[%s260 + $0xc8] sm:$0xff] %v1615
        %2229 = vst [vmem:[%s260 + $0xd0] sm:$0xff] %v1702
        %2230 = vst [vmem:[%s260 + $0xd8] sm:$0xff] %v1704
        %2231 = vst [vmem:[%s260 + $0xe0] sm:$0xff] %v1791
        %2232 = vst [vmem:[%s260 + $0xe8] sm:$0xff] %v1793
        %2233 = vst [vmem:[%s260 + $0xf0] sm:$0xff] %v1880
        %2234 = vst [vmem:[%s260 + $0xf8] sm:$0xff] %v1882
        %2235 = vst [vmem:[%s260 + $0x100] sm:$0xff] %v1263
        %2236 = vst [vmem:[%s260 + $0x108] sm:$0xff] %v1265
        %2237 = vst [vmem:[%s260 + $0x110] sm:$0xff] %v1352
        %2238 = vst [vmem:[%s260 + $0x118] sm:$0xff] %v1354
        %2239 = vst [vmem:[%s260 + $0x120] sm:$0xff] %v1441
        %2240 = vst [vmem:[%s260 + $0x128] sm:$0xff] %v1443
        %2241 = vst [vmem:[%s260 + $0x130] sm:$0xff] %v1530
        %2242 = vst [vmem:[%s260 + $0x138] sm:$0xff] %v1532
        %2243 = vst [vmem:[%s260 + $0x140] sm:$0xff] %v1619
        %2244 = vst [vmem:[%s260 + $0x148] sm:$0xff] %v1621
        %2245 = vst [vmem:[%s260 + $0x150] sm:$0xff] %v1708
        %2246 = vst [vmem:[%s260 + $0x158] sm:$0xff] %v1710
        %2247 = vst [vmem:[%s260 + $0x160] sm:$0xff] %v1797
        %2248 = vst [vmem:[%s260 + $0x168] sm:$0xff] %v1799
        %2249 = vst [vmem:[%s260 + $0x170] sm:$0xff] %v1886
        %2250 = vst [vmem:[%s260 + $0x178] sm:$0xff] %v1888
        %2251 = vst [vmem:[%s260 + $0x180] sm:$0xff] %v2187
        %2252 = vst [vmem:[%s260 + $0x188] sm:$0xff] %v2188
        %2253 = vst [vmem:[%s260 + $0x190] sm:$0xff] %v2189
        %2254 = vst [vmem:[%s260 + $0x198] sm:$0xff] %v2190
        %2255 = vst [vmem:[%s260 + $0x1a0] sm:$0xff] %v2191
        %2256 = vst [vmem:[%s260 + $0x1a8] sm:$0xff] %v2192
        %2257 = vst [vmem:[%s260 + $0x1b0] sm:$0xff] %v2193
        %2258 = vst [vmem:[%s260 + $0x1b8] sm:$0xff] %v2194
        %2259 = vst [vmem:[%s260 + $0x1c0] sm:$0xff] %v2195
        %2260 = vst [vmem:[%s260 + $0x1c8] sm:$0xff] %v2196
        %2261 = vst [vmem:[%s260 + $0x1d0] sm:$0xff] %v2197
        %2262 = vst [vmem:[%s260 + $0x1d8] sm:$0xff] %v2198
        %2263 = vst [vmem:[%s260 + $0x1e0] sm:$0xff] %v2199
        %2264 = vst [vmem:[%s260 + $0x1e8] sm:$0xff] %v2200
        %2265 = vst [vmem:[%s260 + $0x1f0] sm:$0xff] %v2201
        %2266 = vst [vmem:[%s260 + $0x1f8] sm:$0xff] %v2202
        %s2267 = sand.u32 %s156, 1
        %s2268 = scalar_lea.sflag [#allocation4], %s2267
        %s2269 = sand.u32 %s156, 1
        %s2270 = smul.addr %s2269, 512
        %s2271 = scalar_lea.vmem [#allocation5], %s2270
        // Predicated region
        $region45: #{tpu_custom_call.1} parent=39 // pred_check
          %p2272 = pneg %p166
        $region46: #{tpu_custom_call.1} parent=39 // pred_check_branch
          %2274 = sbr.rel (%p2272) target = $region48
        $region47: #{tpu_custom_call.1} parent=39 // pred_region
          %s2275 = smul.u32 16, %s27
          %s2277 = ssub.s32 8192, 8192
          %2278 = vsyncadd %s2268, %s2277
          %s2279 = smul.addr %s26, 64
          %s2280 = sadd.s32 %s2275, %s2279
          %s2281 = smul.addr %s2280, 128
          %s2282 = scalar_lea.hbm %s5, %s2281
          %s2283 = sshll.u32 %s2271, 4
          %s2284 = int_to_ptr.vmem [resolvable:$true] %s2283
          %2289 = dma.vmem_to_hbm [thread:$0]  %s2284, 8192, %s2282, %s2268, 2048, 2048, 128
        $region48: #{tpu_custom_call.1} parent=39 // pred_fallthru
          _
      $region40: #{tpu_custom_call.1} parent=5 // pred_fallthru
        _
      %p2290 = scmp.le.s32.totalorder 2, %s17
      // Predicated region
      $region49: #{tpu_custom_call.1} parent=5 // pred_check
        %p2291 = pneg %p2290
      $region50: #{tpu_custom_call.1} parent=5 // pred_check_branch
        %2293 = sbr.rel (%p2291) target = $region52
      $region51: #{tpu_custom_call.1} parent=5 // pred_region
        %s2294 = ssub.s32 %s17, 2
        // Predicated region
        $region53: #{tpu_custom_call.1} parent=51 // pred_check
          %p2295 = pneg %p172
        $region54: #{tpu_custom_call.1} parent=51 // pred_check_branch
          %2297 = sbr.rel (%p2295) target = $region56
        $region55: #{tpu_custom_call.1} parent=51 // pred_region
          %s2298 = sand.u32 %s157, 1
          %s2299 = scalar_lea.sflag [#allocation4], %s2298
          %s2300 = sand.u32 %s157, 1
          %s2301 = smul.addr %s2300, 512
          %s2302 = scalar_lea.vmem [#allocation5], %s2301
          %2303 = dma.done %s2299, 8192
        $region56: #{tpu_custom_call.1} parent=51 // pred_fallthru
          _
      $region52: #{tpu_custom_call.1} parent=5 // pred_fallthru
        _
    $region6: #{tpu_custom_call.1} parent=1 // loop_footer
      %s21 = sadd.s32 1, %s17
    $region7: #{tpu_custom_call.1} parent=1 // loop_footer_branch
      %16 = sbr.rel target = $region3
    $region8: #{tpu_custom_call.1} parent=1 // loop_exit
      _
    %2304 = vsyncpa [#allocation3], 1
    %s2305 = scalar_lea.sflag [#allocation3], 1
    %2306 = vsyncpa %s2305, 1
    %2307 = vsyncpa [#allocation4], 1
    %s2308 = scalar_lea.sflag [#allocation4], 1
    %2309 = vsyncpa %s2308, 1

</llo_original>
